<compile_context>
chip_gen: v5e
topology: v5e:2x2
jax: 0.10.0
libtpu: 0.0.40
codegen_flags: <defaults>
</compile_context>

<pallas_src>
import jax
import jax.numpy as jnp
import numpy as np
from jax import lax
from jax.experimental import pallas as pl
from jax.experimental.pallas import tpu as pltpu


# ----------------------------------------------------------------------------
# Pallas kernel: whole forward in one invocation (no grid).
#   xw0_ref : (T, B, 4H)  precomputed x @ W_ih0^T + b0   (gate order [i|f|o|g])
#   x_ref   : (T, B, D)   time-major input (for the bmm epilogue)
#   whh0_ref: (H, 4H)     layer-0 recurrent weight (transposed, reordered)
#   w1_ref  : (2H, 4H)    layer-1 [W_ih1^T ; W_hh1^T] concatenated, reordered
#   b1_ref  : (1, 4H)     layer-1 folded bias (reordered)
#   lstm_out_ref : (T, B, H)   raw LSTM output (VMEM-resident, one store)
#   pseudo_ref   : (B, S, D)   pseudo_aligned_out
# ----------------------------------------------------------------------------
def con_kernel(xw0_ref, x_ref, whh0_ref, w1_ref, b1_ref,
               lstm_out_ref, pseudo_ref):
    T, B, H = lstm_out_ref.shape

    whh0 = whh0_ref[...]
    w1 = w1_ref[...]
    b1 = b1_ref[...]

    def gates_to_hc(gates, c_prev):
        # gate order [i | f | o | g]: one sigmoid over (B,3H), one tanh over (B,H)
        sig = jax.nn.sigmoid(gates[:, :3 * H])
        i_g = sig[:, 0 * H:1 * H]
        f_g = sig[:, 1 * H:2 * H]
        o_g = sig[:, 2 * H:3 * H]
        g_g = jnp.tanh(gates[:, 3 * H:4 * H])
        c_new = f_g * c_prev + i_g * g_g
        h_new = o_g * jnp.tanh(c_new)
        return h_new, c_new

    def step(t, carry):
        h0, c0, h1, c1 = carry
        # Layer 0: input projection already hoisted (xw0 includes bias).
        g0 = xw0_ref[t] + jnp.dot(h0, whh0, preferred_element_type=jnp.float32)
        h0n, c0n = gates_to_hc(g0, c0)
        # Layer 1: fused ih/hh matmul.
        inp1 = jnp.concatenate([h0n, h1], axis=-1)            # (B, 2H)
        g1 = jnp.dot(inp1, w1, preferred_element_type=jnp.float32) + b1
        h1n, c1n = gates_to_hc(g1, c1)
        # VMEM-resident output block; DMA'd to HBM once at kernel end.
        lstm_out_ref[t] = h1n
        return (h0n, c0n, h1n, c1n)

    zeros = jnp.zeros((B, H), jnp.float32)
    lax.fori_loop(0, T, step, (zeros, zeros, zeros, zeros), unroll=True)

    # Epilogue (off the recurrence critical path): softmax over hidden dim,
    # drop the blank (index 0), single batched contraction over time.
    h_all = lstm_out_ref[...]                                  # (T, B, H)
    p_tail = jax.nn.softmax(h_all, axis=-1)[:, :, 1:]          # (T, B, S)
    pseudo_ref[...] = jnp.einsum(
        'tbs,tbd->bsd', p_tail, x_ref[...],
        preferred_element_type=jnp.float32).astype(pseudo_ref.dtype)


# ----------------------------------------------------------------------------
# Wrapper: parameter plumbing + pallas_call.
# ----------------------------------------------------------------------------
def con_module_forward(x, params):
    """x: (B, T, D) float32 (batch_first, like the PyTorch module)."""
    (wih0, whh0, bih0, bhh0, wih1, whh1, bih1, bhh1) = params
    B, T, D = x.shape
    H = whh0.shape[-1]          # hidden = out_seq_len + 1
    S = H - 1                   # out_seq_len

    def reorder(w):
        # PyTorch gate-row order [i|f|g|o]  ->  [i|f|o|g]
        return jnp.concatenate([w[:2 * H], w[3 * H:], w[2 * H:3 * H]], axis=0)

    wih0_t = jnp.transpose(reorder(wih0))             # (D, 4H)
    whh0_t = jnp.transpose(reorder(whh0))             # (H, 4H)
    b0 = reorder(bih0 + bhh0)[None, :]                # (1, 4H)
    wih1_t = jnp.transpose(reorder(wih1))             # (H, 4H)
    whh1_t = jnp.transpose(reorder(whh1))             # (H, 4H)
    b1 = reorder(bih1 + bhh1)[None, :]                # (1, 4H)
    w1_cat = jnp.concatenate([wih1_t, whh1_t], axis=0)  # (2H, 4H)

    x_tm = jnp.transpose(x, (1, 0, 2))                # (T, B, D) time-major
    # Hoist the layer-0 input projection out of the recurrence (one big matmul).
    xw0 = jnp.einsum('tbd,dg->tbg', x_tm, wih0_t) + b0  # (T, B, 4H)

    vmem = pl.BlockSpec(memory_space=pltpu.MemorySpace.VMEM)
    lstm_out_tm, pseudo = pl.pallas_call(
        con_kernel,
        out_shape=(
            jax.ShapeDtypeStruct((T, B, H), jnp.float32),
            jax.ShapeDtypeStruct((B, S, D), jnp.float32),
        ),
        in_specs=[vmem] * 5,
        out_specs=(vmem, vmem),
    )(xw0, x_tm, whh0_t, w1_cat, b1)

    lstm_out = jnp.transpose(lstm_out_tm, (1, 0, 2))  # back to (B, T, H)
    return pseudo, lstm_out


# ----------------------------------------------------------------------------
# Pure-JAX reference (mirrors torch.nn.LSTM semantics) for a correctness check.
# ----------------------------------------------------------------------------
def ref_forward(x, params):
    (wih0, whh0, bih0, bhh0, wih1, whh1, bih1, bhh1) = params
    B, T, D = x.shape
    H = whh0.shape[-1]

    def cell(h, c, inp, wih, whh, bih, bhh):
        gates = inp @ wih.T + bih + h @ whh.T + bhh
        i, f, g, o = jnp.split(gates, 4, axis=-1)
        c = jax.nn.sigmoid(f) * c + jax.nn.sigmoid(i) * jnp.tanh(g)
        h = jax.nn.sigmoid(o) * jnp.tanh(c)
        return h, c

    def step(carry, x_t):
        h0, c0, h1, c1 = carry
        h0, c0 = cell(h0, c0, x_t, wih0, whh0, bih0, bhh0)
        h1, c1 = cell(h1, c1, h0, wih1, whh1, bih1, bhh1)
        return (h0, c0, h1, c1), h1

    zeros = jnp.zeros((B, H), jnp.float32)
    _, out_tm = lax.scan(step, (zeros, zeros, zeros, zeros),
                         jnp.transpose(x, (1, 0, 2)))
    lstm_out = jnp.transpose(out_tm, (1, 0, 2))                 # (B, T, H)
    prob = jax.nn.softmax(lstm_out, axis=2)[:, :, 1:]           # (B, T, S)
    pseudo = jnp.einsum('bts,btd->bsd', prob, x)                # (B, S, D)
    return pseudo, lstm_out


# ----------------------------------------------------------------------------
if __name__ == "__main__":
    B, T, in_dim, out_seq_len = 2, 8, 32, 15
    H = out_seq_len + 1

    key = jax.random.PRNGKey(0)
    keys = jax.random.split(key, 9)
    k = 1.0 / np.sqrt(H)
    uni = lambda kk, shape: jax.random.uniform(kk, shape, jnp.float32, -k, k)

    # PyTorch nn.LSTM parameter shapes (num_layers=2).
    params = (
        uni(keys[0], (4 * H, in_dim)),   # weight_ih_l0
        uni(keys[1], (4 * H, H)),        # weight_hh_l0
        uni(keys[2], (4 * H,)),          # bias_ih_l0
        uni(keys[3], (4 * H,)),          # bias_hh_l0
        uni(keys[4], (4 * H, H)),        # weight_ih_l1
        uni(keys[5], (4 * H, H)),        # weight_hh_l1
        uni(keys[6], (4 * H,)),          # bias_ih_l1
        uni(keys[7], (4 * H,)),          # bias_hh_l1
    )
    x = jax.random.normal(keys[8], (B, T, in_dim), jnp.float32)

    pseudo, lstm_out = jax.block_until_ready(con_module_forward(x, params))
    pseudo_ref, lstm_out_ref = jax.block_until_ready(ref_forward(x, params))

    np.testing.assert_allclose(np.asarray(lstm_out), np.asarray(lstm_out_ref),
                               rtol=1e-4, atol=1e-4)
    np.testing.assert_allclose(np.asarray(pseudo), np.asarray(pseudo_ref),
                               rtol=1e-4, atol=1e-4)
    print("KERNEL_OK")
</pallas_src>

<mosaic_0001>
module attributes {stable_mosaic.version = 11 : i64} {
  func.func @con_kernel(%arg0: memref<8x2x64xf32, #tpu.memory_space<vmem>>, %arg1: memref<8x2x32xf32, #tpu.memory_space<vmem>>, %arg2: memref<16x64xf32, #tpu.memory_space<vmem>>, %arg3: memref<32x64xf32, #tpu.memory_space<vmem>>, %arg4: memref<1x64xf32, #tpu.memory_space<vmem>>, %arg5: memref<8x2x16xf32, #tpu.memory_space<vmem>>, %arg6: memref<2x15x32xf32, #tpu.memory_space<vmem>>) attributes {dimension_semantics = [], scalar_prefetch = 0 : i64, scratch_operands = 0 : i64, tpu.core_type = #tpu.core_type<tc>} {
    %c0 = arith.constant 0 : index
    %c0_0 = arith.constant 0 : index
    %0 = vector.load %arg2[%c0, %c0_0] : memref<16x64xf32, #tpu.memory_space<vmem>>, vector<16x64xf32>
    %c0_1 = arith.constant 0 : index
    %c0_2 = arith.constant 0 : index
    %1 = vector.load %arg3[%c0_1, %c0_2] : memref<32x64xf32, #tpu.memory_space<vmem>>, vector<32x64xf32>
    %c0_3 = arith.constant 0 : index
    %c0_4 = arith.constant 0 : index
    %2 = vector.load %arg4[%c0_3, %c0_4] : memref<1x64xf32, #tpu.memory_space<vmem>>, vector<1x64xf32>
    %cst = arith.constant 0.000000e+00 : f32
    %3 = vector.broadcast %cst : f32 to vector<2x16xf32>
    %c0_i32 = arith.constant 0 : i32
    %4 = arith.index_cast %c0_i32 : i32 to index
    %c0_5 = arith.constant 0 : index
    %c0_6 = arith.constant 0 : index
    %5 = vector.load %arg0[%4, %c0_5, %c0_6] : memref<8x2x64xf32, #tpu.memory_space<vmem>>, vector<1x2x64xf32>
    %6 = vector.shape_cast %5 : vector<1x2x64xf32> to vector<2x64xf32>
    %cst_7 = arith.constant dense<0.000000e+00> : vector<2x64xf32>
    %7 = tpu.matmul %3, %0, %cst_7 {dimension_numbers = #tpu.dot_dimension_numbers<[1], [0], [0], [1], [0, 0, 1, 1], [], []>} : vector<2x16xf32>, vector<16x64xf32>, vector<2x64xf32> -> vector<2x64xf32>
    %8 = arith.addf %6, %7 : vector<2x64xf32>
    %9 = vector.extract_strided_slice %8 {offsets = [0, 0], sizes = [2, 48], strides = [1, 1]} : vector<2x64xf32> to vector<2x48xf32>
    %10 = arith.negf %9 : vector<2x48xf32>
    %11 = math.exp %10 : vector<2x48xf32>
    %cst_8 = arith.constant 1.000000e+00 : f32
    %12 = vector.broadcast %cst_8 : f32 to vector<2x48xf32>
    %13 = arith.addf %12, %11 : vector<2x48xf32>
    %14 = arith.divf %12, %13 : vector<2x48xf32>
    %15 = vector.extract_strided_slice %14 {offsets = [0, 0], sizes = [2, 16], strides = [1, 1]} : vector<2x48xf32> to vector<2x16xf32>
    %16 = vector.extract_strided_slice %14 {offsets = [0, 16], sizes = [2, 16], strides = [1, 1]} : vector<2x48xf32> to vector<2x16xf32>
    %17 = vector.extract_strided_slice %14 {offsets = [0, 32], sizes = [2, 16], strides = [1, 1]} : vector<2x48xf32> to vector<2x16xf32>
    %18 = vector.extract_strided_slice %8 {offsets = [0, 48], sizes = [2, 16], strides = [1, 1]} : vector<2x64xf32> to vector<2x16xf32>
    %19 = math.tanh %18 : vector<2x16xf32>
    %20 = arith.mulf %16, %3 : vector<2x16xf32>
    %21 = arith.mulf %15, %19 : vector<2x16xf32>
    %22 = arith.addf %20, %21 : vector<2x16xf32>
    %23 = math.tanh %22 : vector<2x16xf32>
    %24 = arith.mulf %17, %23 : vector<2x16xf32>
    %25 = tpu.concatenate %24, %3 in 1 : vector<2x16xf32>, vector<2x16xf32> -> vector<2x32xf32>
    %cst_9 = arith.constant dense<0.000000e+00> : vector<2x64xf32>
    %26 = tpu.matmul %25, %1, %cst_9 {dimension_numbers = #tpu.dot_dimension_numbers<[1], [0], [0], [1], [0, 0, 1, 1], [], []>} : vector<2x32xf32>, vector<32x64xf32>, vector<2x64xf32> -> vector<2x64xf32>
    %27 = vector.broadcast %2 : vector<1x64xf32> to vector<2x64xf32>
    %28 = arith.addf %26, %27 : vector<2x64xf32>
    %29 = vector.extract_strided_slice %28 {offsets = [0, 0], sizes = [2, 48], strides = [1, 1]} : vector<2x64xf32> to vector<2x48xf32>
    %30 = arith.negf %29 : vector<2x48xf32>
    %31 = math.exp %30 : vector<2x48xf32>
    %cst_10 = arith.constant 1.000000e+00 : f32
    %32 = vector.broadcast %cst_10 : f32 to vector<2x48xf32>
    %33 = arith.addf %32, %31 : vector<2x48xf32>
    %34 = arith.divf %32, %33 : vector<2x48xf32>
    %35 = vector.extract_strided_slice %34 {offsets = [0, 0], sizes = [2, 16], strides = [1, 1]} : vector<2x48xf32> to vector<2x16xf32>
    %36 = vector.extract_strided_slice %34 {offsets = [0, 16], sizes = [2, 16], strides = [1, 1]} : vector<2x48xf32> to vector<2x16xf32>
    %37 = vector.extract_strided_slice %34 {offsets = [0, 32], sizes = [2, 16], strides = [1, 1]} : vector<2x48xf32> to vector<2x16xf32>
    %38 = vector.extract_strided_slice %28 {offsets = [0, 48], sizes = [2, 16], strides = [1, 1]} : vector<2x64xf32> to vector<2x16xf32>
    %39 = math.tanh %38 : vector<2x16xf32>
    %40 = arith.mulf %36, %3 : vector<2x16xf32>
    %41 = arith.mulf %35, %39 : vector<2x16xf32>
    %42 = arith.addf %40, %41 : vector<2x16xf32>
    %43 = math.tanh %42 : vector<2x16xf32>
    %44 = arith.mulf %37, %43 : vector<2x16xf32>
    %45 = arith.index_cast %c0_i32 : i32 to index
    %c0_11 = arith.constant 0 : index
    %c0_12 = arith.constant 0 : index
    %46 = vector.load %arg5[%45, %c0_11, %c0_12] : memref<8x2x16xf32, #tpu.memory_space<vmem>>, vector<1x2x16xf32>
    %47 = vector.shape_cast %46 : vector<1x2x16xf32> to vector<2x16xf32>
    %48 = vector.shape_cast %44 : vector<2x16xf32> to vector<1x2x16xf32>
    tpu.vector_store %arg5[%45, %c0_11, %c0_12], %48 {strides = array<i32>} : memref<8x2x16xf32, #tpu.memory_space<vmem>>, vector<1x2x16xf32>,
    %c1_i32 = arith.constant 1 : i32
    %49 = arith.index_cast %c1_i32 : i32 to index
    %c0_13 = arith.constant 0 : index
    %c0_14 = arith.constant 0 : index
    %50 = vector.load %arg0[%49, %c0_13, %c0_14] : memref<8x2x64xf32, #tpu.memory_space<vmem>>, vector<1x2x64xf32>
    %51 = vector.shape_cast %50 : vector<1x2x64xf32> to vector<2x64xf32>
    %cst_15 = arith.constant dense<0.000000e+00> : vector<2x64xf32>
    %52 = tpu.matmul %24, %0, %cst_15 {dimension_numbers = #tpu.dot_dimension_numbers<[1], [0], [0], [1], [0, 0, 1, 1], [], []>} : vector<2x16xf32>, vector<16x64xf32>, vector<2x64xf32> -> vector<2x64xf32>
    %53 = arith.addf %51, %52 : vector<2x64xf32>
    %54 = vector.extract_strided_slice %53 {offsets = [0, 0], sizes = [2, 48], strides = [1, 1]} : vector<2x64xf32> to vector<2x48xf32>
    %55 = arith.negf %54 : vector<2x48xf32>
    %56 = math.exp %55 : vector<2x48xf32>
    %cst_16 = arith.constant 1.000000e+00 : f32
    %57 = vector.broadcast %cst_16 : f32 to vector<2x48xf32>
    %58 = arith.addf %57, %56 : vector<2x48xf32>
    %59 = arith.divf %57, %58 : vector<2x48xf32>
    %60 = vector.extract_strided_slice %59 {offsets = [0, 0], sizes = [2, 16], strides = [1, 1]} : vector<2x48xf32> to vector<2x16xf32>
    %61 = vector.extract_strided_slice %59 {offsets = [0, 16], sizes = [2, 16], strides = [1, 1]} : vector<2x48xf32> to vector<2x16xf32>
    %62 = vector.extract_strided_slice %59 {offsets = [0, 32], sizes = [2, 16], strides = [1, 1]} : vector<2x48xf32> to vector<2x16xf32>
    %63 = vector.extract_strided_slice %53 {offsets = [0, 48], sizes = [2, 16], strides = [1, 1]} : vector<2x64xf32> to vector<2x16xf32>
    %64 = math.tanh %63 : vector<2x16xf32>
    %65 = arith.mulf %61, %22 : vector<2x16xf32>
    %66 = arith.mulf %60, %64 : vector<2x16xf32>
    %67 = arith.addf %65, %66 : vector<2x16xf32>
    %68 = math.tanh %67 : vector<2x16xf32>
    %69 = arith.mulf %62, %68 : vector<2x16xf32>
    %70 = tpu.concatenate %69, %44 in 1 : vector<2x16xf32>, vector<2x16xf32> -> vector<2x32xf32>
    %cst_17 = arith.constant dense<0.000000e+00> : vector<2x64xf32>
    %71 = tpu.matmul %70, %1, %cst_17 {dimension_numbers = #tpu.dot_dimension_numbers<[1], [0], [0], [1], [0, 0, 1, 1], [], []>} : vector<2x32xf32>, vector<32x64xf32>, vector<2x64xf32> -> vector<2x64xf32>
    %72 = vector.broadcast %2 : vector<1x64xf32> to vector<2x64xf32>
    %73 = arith.addf %71, %72 : vector<2x64xf32>
    %74 = vector.extract_strided_slice %73 {offsets = [0, 0], sizes = [2, 48], strides = [1, 1]} : vector<2x64xf32> to vector<2x48xf32>
    %75 = arith.negf %74 : vector<2x48xf32>
    %76 = math.exp %75 : vector<2x48xf32>
    %cst_18 = arith.constant 1.000000e+00 : f32
    %77 = vector.broadcast %cst_18 : f32 to vector<2x48xf32>
    %78 = arith.addf %77, %76 : vector<2x48xf32>
    %79 = arith.divf %77, %78 : vector<2x48xf32>
    %80 = vector.extract_strided_slice %79 {offsets = [0, 0], sizes = [2, 16], strides = [1, 1]} : vector<2x48xf32> to vector<2x16xf32>
    %81 = vector.extract_strided_slice %79 {offsets = [0, 16], sizes = [2, 16], strides = [1, 1]} : vector<2x48xf32> to vector<2x16xf32>
    %82 = vector.extract_strided_slice %79 {offsets = [0, 32], sizes = [2, 16], strides = [1, 1]} : vector<2x48xf32> to vector<2x16xf32>
    %83 = vector.extract_strided_slice %73 {offsets = [0, 48], sizes = [2, 16], strides = [1, 1]} : vector<2x64xf32> to vector<2x16xf32>
    %84 = math.tanh %83 : vector<2x16xf32>
    %85 = arith.mulf %81, %42 : vector<2x16xf32>
    %86 = arith.mulf %80, %84 : vector<2x16xf32>
    %87 = arith.addf %85, %86 : vector<2x16xf32>
    %88 = math.tanh %87 : vector<2x16xf32>
    %89 = arith.mulf %82, %88 : vector<2x16xf32>
    %90 = arith.index_cast %c1_i32 : i32 to index
    %c0_19 = arith.constant 0 : index
    %c0_20 = arith.constant 0 : index
    %91 = vector.load %arg5[%90, %c0_19, %c0_20] : memref<8x2x16xf32, #tpu.memory_space<vmem>>, vector<1x2x16xf32>
    %92 = vector.shape_cast %91 : vector<1x2x16xf32> to vector<2x16xf32>
    %93 = vector.shape_cast %89 : vector<2x16xf32> to vector<1x2x16xf32>
    tpu.vector_store %arg5[%90, %c0_19, %c0_20], %93 {strides = array<i32>} : memref<8x2x16xf32, #tpu.memory_space<vmem>>, vector<1x2x16xf32>,
    %c2_i32 = arith.constant 2 : i32
    %94 = arith.index_cast %c2_i32 : i32 to index
    %c0_21 = arith.constant 0 : index
    %c0_22 = arith.constant 0 : index
    %95 = vector.load %arg0[%94, %c0_21, %c0_22] : memref<8x2x64xf32, #tpu.memory_space<vmem>>, vector<1x2x64xf32>
    %96 = vector.shape_cast %95 : vector<1x2x64xf32> to vector<2x64xf32>
    %cst_23 = arith.constant dense<0.000000e+00> : vector<2x64xf32>
    %97 = tpu.matmul %69, %0, %cst_23 {dimension_numbers = #tpu.dot_dimension_numbers<[1], [0], [0], [1], [0, 0, 1, 1], [], []>} : vector<2x16xf32>, vector<16x64xf32>, vector<2x64xf32> -> vector<2x64xf32>
    %98 = arith.addf %96, %97 : vector<2x64xf32>
    %99 = vector.extract_strided_slice %98 {offsets = [0, 0], sizes = [2, 48], strides = [1, 1]} : vector<2x64xf32> to vector<2x48xf32>
    %100 = arith.negf %99 : vector<2x48xf32>
    %101 = math.exp %100 : vector<2x48xf32>
    %cst_24 = arith.constant 1.000000e+00 : f32
    %102 = vector.broadcast %cst_24 : f32 to vector<2x48xf32>
    %103 = arith.addf %102, %101 : vector<2x48xf32>
    %104 = arith.divf %102, %103 : vector<2x48xf32>
    %105 = vector.extract_strided_slice %104 {offsets = [0, 0], sizes = [2, 16], strides = [1, 1]} : vector<2x48xf32> to vector<2x16xf32>
    %106 = vector.extract_strided_slice %104 {offsets = [0, 16], sizes = [2, 16], strides = [1, 1]} : vector<2x48xf32> to vector<2x16xf32>
    %107 = vector.extract_strided_slice %104 {offsets = [0, 32], sizes = [2, 16], strides = [1, 1]} : vector<2x48xf32> to vector<2x16xf32>
    %108 = vector.extract_strided_slice %98 {offsets = [0, 48], sizes = [2, 16], strides = [1, 1]} : vector<2x64xf32> to vector<2x16xf32>
    %109 = math.tanh %108 : vector<2x16xf32>
    %110 = arith.mulf %106, %67 : vector<2x16xf32>
    %111 = arith.mulf %105, %109 : vector<2x16xf32>
    %112 = arith.addf %110, %111 : vector<2x16xf32>
    %113 = math.tanh %112 : vector<2x16xf32>
    %114 = arith.mulf %107, %113 : vector<2x16xf32>
    %115 = tpu.concatenate %114, %89 in 1 : vector<2x16xf32>, vector<2x16xf32> -> vector<2x32xf32>
    %cst_25 = arith.constant dense<0.000000e+00> : vector<2x64xf32>
    %116 = tpu.matmul %115, %1, %cst_25 {dimension_numbers = #tpu.dot_dimension_numbers<[1], [0], [0], [1], [0, 0, 1, 1], [], []>} : vector<2x32xf32>, vector<32x64xf32>, vector<2x64xf32> -> vector<2x64xf32>
    %117 = vector.broadcast %2 : vector<1x64xf32> to vector<2x64xf32>
    %118 = arith.addf %116, %117 : vector<2x64xf32>
    %119 = vector.extract_strided_slice %118 {offsets = [0, 0], sizes = [2, 48], strides = [1, 1]} : vector<2x64xf32> to vector<2x48xf32>
    %120 = arith.negf %119 : vector<2x48xf32>
    %121 = math.exp %120 : vector<2x48xf32>
    %cst_26 = arith.constant 1.000000e+00 : f32
    %122 = vector.broadcast %cst_26 : f32 to vector<2x48xf32>
    %123 = arith.addf %122, %121 : vector<2x48xf32>
    %124 = arith.divf %122, %123 : vector<2x48xf32>
    %125 = vector.extract_strided_slice %124 {offsets = [0, 0], sizes = [2, 16], strides = [1, 1]} : vector<2x48xf32> to vector<2x16xf32>
    %126 = vector.extract_strided_slice %124 {offsets = [0, 16], sizes = [2, 16], strides = [1, 1]} : vector<2x48xf32> to vector<2x16xf32>
    %127 = vector.extract_strided_slice %124 {offsets = [0, 32], sizes = [2, 16], strides = [1, 1]} : vector<2x48xf32> to vector<2x16xf32>
    %128 = vector.extract_strided_slice %118 {offsets = [0, 48], sizes = [2, 16], strides = [1, 1]} : vector<2x64xf32> to vector<2x16xf32>
    %129 = math.tanh %128 : vector<2x16xf32>
    %130 = arith.mulf %126, %87 : vector<2x16xf32>
    %131 = arith.mulf %125, %129 : vector<2x16xf32>
    %132 = arith.addf %130, %131 : vector<2x16xf32>
    %133 = math.tanh %132 : vector<2x16xf32>
    %134 = arith.mulf %127, %133 : vector<2x16xf32>
    %135 = arith.index_cast %c2_i32 : i32 to index
    %c0_27 = arith.constant 0 : index
    %c0_28 = arith.constant 0 : index
    %136 = vector.load %arg5[%135, %c0_27, %c0_28] : memref<8x2x16xf32, #tpu.memory_space<vmem>>, vector<1x2x16xf32>
    %137 = vector.shape_cast %136 : vector<1x2x16xf32> to vector<2x16xf32>
    %138 = vector.shape_cast %134 : vector<2x16xf32> to vector<1x2x16xf32>
    tpu.vector_store %arg5[%135, %c0_27, %c0_28], %138 {strides = array<i32>} : memref<8x2x16xf32, #tpu.memory_space<vmem>>, vector<1x2x16xf32>,
    %c3_i32 = arith.constant 3 : i32
    %139 = arith.index_cast %c3_i32 : i32 to index
    %c0_29 = arith.constant 0 : index
    %c0_30 = arith.constant 0 : index
    %140 = vector.load %arg0[%139, %c0_29, %c0_30] : memref<8x2x64xf32, #tpu.memory_space<vmem>>, vector<1x2x64xf32>
    %141 = vector.shape_cast %140 : vector<1x2x64xf32> to vector<2x64xf32>
    %cst_31 = arith.constant dense<0.000000e+00> : vector<2x64xf32>
    %142 = tpu.matmul %114, %0, %cst_31 {dimension_numbers = #tpu.dot_dimension_numbers<[1], [0], [0], [1], [0, 0, 1, 1], [], []>} : vector<2x16xf32>, vector<16x64xf32>, vector<2x64xf32> -> vector<2x64xf32>
    %143 = arith.addf %141, %142 : vector<2x64xf32>
    %144 = vector.extract_strided_slice %143 {offsets = [0, 0], sizes = [2, 48], strides = [1, 1]} : vector<2x64xf32> to vector<2x48xf32>
    %145 = arith.negf %144 : vector<2x48xf32>
    %146 = math.exp %145 : vector<2x48xf32>
    %cst_32 = arith.constant 1.000000e+00 : f32
    %147 = vector.broadcast %cst_32 : f32 to vector<2x48xf32>
    %148 = arith.addf %147, %146 : vector<2x48xf32>
    %149 = arith.divf %147, %148 : vector<2x48xf32>
    %150 = vector.extract_strided_slice %149 {offsets = [0, 0], sizes = [2, 16], strides = [1, 1]} : vector<2x48xf32> to vector<2x16xf32>
    %151 = vector.extract_strided_slice %149 {offsets = [0, 16], sizes = [2, 16], strides = [1, 1]} : vector<2x48xf32> to vector<2x16xf32>
    %152 = vector.extract_strided_slice %149 {offsets = [0, 32], sizes = [2, 16], strides = [1, 1]} : vector<2x48xf32> to vector<2x16xf32>
    %153 = vector.extract_strided_slice %143 {offsets = [0, 48], sizes = [2, 16], strides = [1, 1]} : vector<2x64xf32> to vector<2x16xf32>
    %154 = math.tanh %153 : vector<2x16xf32>
    %155 = arith.mulf %151, %112 : vector<2x16xf32>
    %156 = arith.mulf %150, %154 : vector<2x16xf32>
    %157 = arith.addf %155, %156 : vector<2x16xf32>
    %158 = math.tanh %157 : vector<2x16xf32>
    %159 = arith.mulf %152, %158 : vector<2x16xf32>
    %160 = tpu.concatenate %159, %134 in 1 : vector<2x16xf32>, vector<2x16xf32> -> vector<2x32xf32>
    %cst_33 = arith.constant dense<0.000000e+00> : vector<2x64xf32>
    %161 = tpu.matmul %160, %1, %cst_33 {dimension_numbers = #tpu.dot_dimension_numbers<[1], [0], [0], [1], [0, 0, 1, 1], [], []>} : vector<2x32xf32>, vector<32x64xf32>, vector<2x64xf32> -> vector<2x64xf32>
    %162 = vector.broadcast %2 : vector<1x64xf32> to vector<2x64xf32>
    %163 = arith.addf %161, %162 : vector<2x64xf32>
    %164 = vector.extract_strided_slice %163 {offsets = [0, 0], sizes = [2, 48], strides = [1, 1]} : vector<2x64xf32> to vector<2x48xf32>
    %165 = arith.negf %164 : vector<2x48xf32>
    %166 = math.exp %165 : vector<2x48xf32>
    %cst_34 = arith.constant 1.000000e+00 : f32
    %167 = vector.broadcast %cst_34 : f32 to vector<2x48xf32>
    %168 = arith.addf %167, %166 : vector<2x48xf32>
    %169 = arith.divf %167, %168 : vector<2x48xf32>
    %170 = vector.extract_strided_slice %169 {offsets = [0, 0], sizes = [2, 16], strides = [1, 1]} : vector<2x48xf32> to vector<2x16xf32>
    %171 = vector.extract_strided_slice %169 {offsets = [0, 16], sizes = [2, 16], strides = [1, 1]} : vector<2x48xf32> to vector<2x16xf32>
    %172 = vector.extract_strided_slice %169 {offsets = [0, 32], sizes = [2, 16], strides = [1, 1]} : vector<2x48xf32> to vector<2x16xf32>
    %173 = vector.extract_strided_slice %163 {offsets = [0, 48], sizes = [2, 16], strides = [1, 1]} : vector<2x64xf32> to vector<2x16xf32>
    %174 = math.tanh %173 : vector<2x16xf32>
    %175 = arith.mulf %171, %132 : vector<2x16xf32>
    %176 = arith.mulf %170, %174 : vector<2x16xf32>
    %177 = arith.addf %175, %176 : vector<2x16xf32>
    %178 = math.tanh %177 : vector<2x16xf32>
    %179 = arith.mulf %172, %178 : vector<2x16xf32>
    %180 = arith.index_cast %c3_i32 : i32 to index
    %c0_35 = arith.constant 0 : index
    %c0_36 = arith.constant 0 : index
    %181 = vector.load %arg5[%180, %c0_35, %c0_36] : memref<8x2x16xf32, #tpu.memory_space<vmem>>, vector<1x2x16xf32>
    %182 = vector.shape_cast %181 : vector<1x2x16xf32> to vector<2x16xf32>
    %183 = vector.shape_cast %179 : vector<2x16xf32> to vector<1x2x16xf32>
    tpu.vector_store %arg5[%180, %c0_35, %c0_36], %183 {strides = array<i32>} : memref<8x2x16xf32, #tpu.memory_space<vmem>>, vector<1x2x16xf32>,
    %c4_i32 = arith.constant 4 : i32
    %184 = arith.index_cast %c4_i32 : i32 to index
    %c0_37 = arith.constant 0 : index
    %c0_38 = arith.constant 0 : index
    %185 = vector.load %arg0[%184, %c0_37, %c0_38] : memref<8x2x64xf32, #tpu.memory_space<vmem>>, vector<1x2x64xf32>
    %186 = vector.shape_cast %185 : vector<1x2x64xf32> to vector<2x64xf32>
    %cst_39 = arith.constant dense<0.000000e+00> : vector<2x64xf32>
    %187 = tpu.matmul %159, %0, %cst_39 {dimension_numbers = #tpu.dot_dimension_numbers<[1], [0], [0], [1], [0, 0, 1, 1], [], []>} : vector<2x16xf32>, vector<16x64xf32>, vector<2x64xf32> -> vector<2x64xf32>
    %188 = arith.addf %186, %187 : vector<2x64xf32>
    %189 = vector.extract_strided_slice %188 {offsets = [0, 0], sizes = [2, 48], strides = [1, 1]} : vector<2x64xf32> to vector<2x48xf32>
    %190 = arith.negf %189 : vector<2x48xf32>
    %191 = math.exp %190 : vector<2x48xf32>
    %cst_40 = arith.constant 1.000000e+00 : f32
    %192 = vector.broadcast %cst_40 : f32 to vector<2x48xf32>
    %193 = arith.addf %192, %191 : vector<2x48xf32>
    %194 = arith.divf %192, %193 : vector<2x48xf32>
    %195 = vector.extract_strided_slice %194 {offsets = [0, 0], sizes = [2, 16], strides = [1, 1]} : vector<2x48xf32> to vector<2x16xf32>
    %196 = vector.extract_strided_slice %194 {offsets = [0, 16], sizes = [2, 16], strides = [1, 1]} : vector<2x48xf32> to vector<2x16xf32>
    %197 = vector.extract_strided_slice %194 {offsets = [0, 32], sizes = [2, 16], strides = [1, 1]} : vector<2x48xf32> to vector<2x16xf32>
    %198 = vector.extract_strided_slice %188 {offsets = [0, 48], sizes = [2, 16], strides = [1, 1]} : vector<2x64xf32> to vector<2x16xf32>
    %199 = math.tanh %198 : vector<2x16xf32>
    %200 = arith.mulf %196, %157 : vector<2x16xf32>
    %201 = arith.mulf %195, %199 : vector<2x16xf32>
    %202 = arith.addf %200, %201 : vector<2x16xf32>
    %203 = math.tanh %202 : vector<2x16xf32>
    %204 = arith.mulf %197, %203 : vector<2x16xf32>
    %205 = tpu.concatenate %204, %179 in 1 : vector<2x16xf32>, vector<2x16xf32> -> vector<2x32xf32>
    %cst_41 = arith.constant dense<0.000000e+00> : vector<2x64xf32>
    %206 = tpu.matmul %205, %1, %cst_41 {dimension_numbers = #tpu.dot_dimension_numbers<[1], [0], [0], [1], [0, 0, 1, 1], [], []>} : vector<2x32xf32>, vector<32x64xf32>, vector<2x64xf32> -> vector<2x64xf32>
    %207 = vector.broadcast %2 : vector<1x64xf32> to vector<2x64xf32>
    %208 = arith.addf %206, %207 : vector<2x64xf32>
    %209 = vector.extract_strided_slice %208 {offsets = [0, 0], sizes = [2, 48], strides = [1, 1]} : vector<2x64xf32> to vector<2x48xf32>
    %210 = arith.negf %209 : vector<2x48xf32>
    %211 = math.exp %210 : vector<2x48xf32>
    %cst_42 = arith.constant 1.000000e+00 : f32
    %212 = vector.broadcast %cst_42 : f32 to vector<2x48xf32>
    %213 = arith.addf %212, %211 : vector<2x48xf32>
    %214 = arith.divf %212, %213 : vector<2x48xf32>
    %215 = vector.extract_strided_slice %214 {offsets = [0, 0], sizes = [2, 16], strides = [1, 1]} : vector<2x48xf32> to vector<2x16xf32>
    %216 = vector.extract_strided_slice %214 {offsets = [0, 16], sizes = [2, 16], strides = [1, 1]} : vector<2x48xf32> to vector<2x16xf32>
    %217 = vector.extract_strided_slice %214 {offsets = [0, 32], sizes = [2, 16], strides = [1, 1]} : vector<2x48xf32> to vector<2x16xf32>
    %218 = vector.extract_strided_slice %208 {offsets = [0, 48], sizes = [2, 16], strides = [1, 1]} : vector<2x64xf32> to vector<2x16xf32>
    %219 = math.tanh %218 : vector<2x16xf32>
    %220 = arith.mulf %216, %177 : vector<2x16xf32>
    %221 = arith.mulf %215, %219 : vector<2x16xf32>
    %222 = arith.addf %220, %221 : vector<2x16xf32>
    %223 = math.tanh %222 : vector<2x16xf32>
    %224 = arith.mulf %217, %223 : vector<2x16xf32>
    %225 = arith.index_cast %c4_i32 : i32 to index
    %c0_43 = arith.constant 0 : index
    %c0_44 = arith.constant 0 : index
    %226 = vector.load %arg5[%225, %c0_43, %c0_44] : memref<8x2x16xf32, #tpu.memory_space<vmem>>, vector<1x2x16xf32>
    %227 = vector.shape_cast %226 : vector<1x2x16xf32> to vector<2x16xf32>
    %228 = vector.shape_cast %224 : vector<2x16xf32> to vector<1x2x16xf32>
    tpu.vector_store %arg5[%225, %c0_43, %c0_44], %228 {strides = array<i32>} : memref<8x2x16xf32, #tpu.memory_space<vmem>>, vector<1x2x16xf32>,
    %c5_i32 = arith.constant 5 : i32
    %229 = arith.index_cast %c5_i32 : i32 to index
    %c0_45 = arith.constant 0 : index
    %c0_46 = arith.constant 0 : index
    %230 = vector.load %arg0[%229, %c0_45, %c0_46] : memref<8x2x64xf32, #tpu.memory_space<vmem>>, vector<1x2x64xf32>
    %231 = vector.shape_cast %230 : vector<1x2x64xf32> to vector<2x64xf32>
    %cst_47 = arith.constant dense<0.000000e+00> : vector<2x64xf32>
    %232 = tpu.matmul %204, %0, %cst_47 {dimension_numbers = #tpu.dot_dimension_numbers<[1], [0], [0], [1], [0, 0, 1, 1], [], []>} : vector<2x16xf32>, vector<16x64xf32>, vector<2x64xf32> -> vector<2x64xf32>
    %233 = arith.addf %231, %232 : vector<2x64xf32>
    %234 = vector.extract_strided_slice %233 {offsets = [0, 0], sizes = [2, 48], strides = [1, 1]} : vector<2x64xf32> to vector<2x48xf32>
    %235 = arith.negf %234 : vector<2x48xf32>
    %236 = math.exp %235 : vector<2x48xf32>
    %cst_48 = arith.constant 1.000000e+00 : f32
    %237 = vector.broadcast %cst_48 : f32 to vector<2x48xf32>
    %238 = arith.addf %237, %236 : vector<2x48xf32>
    %239 = arith.divf %237, %238 : vector<2x48xf32>
    %240 = vector.extract_strided_slice %239 {offsets = [0, 0], sizes = [2, 16], strides = [1, 1]} : vector<2x48xf32> to vector<2x16xf32>
    %241 = vector.extract_strided_slice %239 {offsets = [0, 16], sizes = [2, 16], strides = [1, 1]} : vector<2x48xf32> to vector<2x16xf32>
    %242 = vector.extract_strided_slice %239 {offsets = [0, 32], sizes = [2, 16], strides = [1, 1]} : vector<2x48xf32> to vector<2x16xf32>
    %243 = vector.extract_strided_slice %233 {offsets = [0, 48], sizes = [2, 16], strides = [1, 1]} : vector<2x64xf32> to vector<2x16xf32>
    %244 = math.tanh %243 : vector<2x16xf32>
    %245 = arith.mulf %241, %202 : vector<2x16xf32>
    %246 = arith.mulf %240, %244 : vector<2x16xf32>
    %247 = arith.addf %245, %246 : vector<2x16xf32>
    %248 = math.tanh %247 : vector<2x16xf32>
    %249 = arith.mulf %242, %248 : vector<2x16xf32>
    %250 = tpu.concatenate %249, %224 in 1 : vector<2x16xf32>, vector<2x16xf32> -> vector<2x32xf32>
    %cst_49 = arith.constant dense<0.000000e+00> : vector<2x64xf32>
    %251 = tpu.matmul %250, %1, %cst_49 {dimension_numbers = #tpu.dot_dimension_numbers<[1], [0], [0], [1], [0, 0, 1, 1], [], []>} : vector<2x32xf32>, vector<32x64xf32>, vector<2x64xf32> -> vector<2x64xf32>
    %252 = vector.broadcast %2 : vector<1x64xf32> to vector<2x64xf32>
    %253 = arith.addf %251, %252 : vector<2x64xf32>
    %254 = vector.extract_strided_slice %253 {offsets = [0, 0], sizes = [2, 48], strides = [1, 1]} : vector<2x64xf32> to vector<2x48xf32>
    %255 = arith.negf %254 : vector<2x48xf32>
    %256 = math.exp %255 : vector<2x48xf32>
    %cst_50 = arith.constant 1.000000e+00 : f32
    %257 = vector.broadcast %cst_50 : f32 to vector<2x48xf32>
    %258 = arith.addf %257, %256 : vector<2x48xf32>
    %259 = arith.divf %257, %258 : vector<2x48xf32>
    %260 = vector.extract_strided_slice %259 {offsets = [0, 0], sizes = [2, 16], strides = [1, 1]} : vector<2x48xf32> to vector<2x16xf32>
    %261 = vector.extract_strided_slice %259 {offsets = [0, 16], sizes = [2, 16], strides = [1, 1]} : vector<2x48xf32> to vector<2x16xf32>
    %262 = vector.extract_strided_slice %259 {offsets = [0, 32], sizes = [2, 16], strides = [1, 1]} : vector<2x48xf32> to vector<2x16xf32>
    %263 = vector.extract_strided_slice %253 {offsets = [0, 48], sizes = [2, 16], strides = [1, 1]} : vector<2x64xf32> to vector<2x16xf32>
    %264 = math.tanh %263 : vector<2x16xf32>
    %265 = arith.mulf %261, %222 : vector<2x16xf32>
    %266 = arith.mulf %260, %264 : vector<2x16xf32>
    %267 = arith.addf %265, %266 : vector<2x16xf32>
    %268 = math.tanh %267 : vector<2x16xf32>
    %269 = arith.mulf %262, %268 : vector<2x16xf32>
    %270 = arith.index_cast %c5_i32 : i32 to index
    %c0_51 = arith.constant 0 : index
    %c0_52 = arith.constant 0 : index
    %271 = vector.load %arg5[%270, %c0_51, %c0_52] : memref<8x2x16xf32, #tpu.memory_space<vmem>>, vector<1x2x16xf32>
    %272 = vector.shape_cast %271 : vector<1x2x16xf32> to vector<2x16xf32>
    %273 = vector.shape_cast %269 : vector<2x16xf32> to vector<1x2x16xf32>
    tpu.vector_store %arg5[%270, %c0_51, %c0_52], %273 {strides = array<i32>} : memref<8x2x16xf32, #tpu.memory_space<vmem>>, vector<1x2x16xf32>,
    %c6_i32 = arith.constant 6 : i32
    %274 = arith.index_cast %c6_i32 : i32 to index
    %c0_53 = arith.constant 0 : index
    %c0_54 = arith.constant 0 : index
    %275 = vector.load %arg0[%274, %c0_53, %c0_54] : memref<8x2x64xf32, #tpu.memory_space<vmem>>, vector<1x2x64xf32>
    %276 = vector.shape_cast %275 : vector<1x2x64xf32> to vector<2x64xf32>
    %cst_55 = arith.constant dense<0.000000e+00> : vector<2x64xf32>
    %277 = tpu.matmul %249, %0, %cst_55 {dimension_numbers = #tpu.dot_dimension_numbers<[1], [0], [0], [1], [0, 0, 1, 1], [], []>} : vector<2x16xf32>, vector<16x64xf32>, vector<2x64xf32> -> vector<2x64xf32>
    %278 = arith.addf %276, %277 : vector<2x64xf32>
    %279 = vector.extract_strided_slice %278 {offsets = [0, 0], sizes = [2, 48], strides = [1, 1]} : vector<2x64xf32> to vector<2x48xf32>
    %280 = arith.negf %279 : vector<2x48xf32>
    %281 = math.exp %280 : vector<2x48xf32>
    %cst_56 = arith.constant 1.000000e+00 : f32
    %282 = vector.broadcast %cst_56 : f32 to vector<2x48xf32>
    %283 = arith.addf %282, %281 : vector<2x48xf32>
    %284 = arith.divf %282, %283 : vector<2x48xf32>
    %285 = vector.extract_strided_slice %284 {offsets = [0, 0], sizes = [2, 16], strides = [1, 1]} : vector<2x48xf32> to vector<2x16xf32>
    %286 = vector.extract_strided_slice %284 {offsets = [0, 16], sizes = [2, 16], strides = [1, 1]} : vector<2x48xf32> to vector<2x16xf32>
    %287 = vector.extract_strided_slice %284 {offsets = [0, 32], sizes = [2, 16], strides = [1, 1]} : vector<2x48xf32> to vector<2x16xf32>
    %288 = vector.extract_strided_slice %278 {offsets = [0, 48], sizes = [2, 16], strides = [1, 1]} : vector<2x64xf32> to vector<2x16xf32>
    %289 = math.tanh %288 : vector<2x16xf32>
    %290 = arith.mulf %286, %247 : vector<2x16xf32>
    %291 = arith.mulf %285, %289 : vector<2x16xf32>
    %292 = arith.addf %290, %291 : vector<2x16xf32>
    %293 = math.tanh %292 : vector<2x16xf32>
    %294 = arith.mulf %287, %293 : vector<2x16xf32>
    %295 = tpu.concatenate %294, %269 in 1 : vector<2x16xf32>, vector<2x16xf32> -> vector<2x32xf32>
    %cst_57 = arith.constant dense<0.000000e+00> : vector<2x64xf32>
    %296 = tpu.matmul %295, %1, %cst_57 {dimension_numbers = #tpu.dot_dimension_numbers<[1], [0], [0], [1], [0, 0, 1, 1], [], []>} : vector<2x32xf32>, vector<32x64xf32>, vector<2x64xf32> -> vector<2x64xf32>
    %297 = vector.broadcast %2 : vector<1x64xf32> to vector<2x64xf32>
    %298 = arith.addf %296, %297 : vector<2x64xf32>
    %299 = vector.extract_strided_slice %298 {offsets = [0, 0], sizes = [2, 48], strides = [1, 1]} : vector<2x64xf32> to vector<2x48xf32>
    %300 = arith.negf %299 : vector<2x48xf32>
    %301 = math.exp %300 : vector<2x48xf32>
    %cst_58 = arith.constant 1.000000e+00 : f32
    %302 = vector.broadcast %cst_58 : f32 to vector<2x48xf32>
    %303 = arith.addf %302, %301 : vector<2x48xf32>
    %304 = arith.divf %302, %303 : vector<2x48xf32>
    %305 = vector.extract_strided_slice %304 {offsets = [0, 0], sizes = [2, 16], strides = [1, 1]} : vector<2x48xf32> to vector<2x16xf32>
    %306 = vector.extract_strided_slice %304 {offsets = [0, 16], sizes = [2, 16], strides = [1, 1]} : vector<2x48xf32> to vector<2x16xf32>
    %307 = vector.extract_strided_slice %304 {offsets = [0, 32], sizes = [2, 16], strides = [1, 1]} : vector<2x48xf32> to vector<2x16xf32>
    %308 = vector.extract_strided_slice %298 {offsets = [0, 48], sizes = [2, 16], strides = [1, 1]} : vector<2x64xf32> to vector<2x16xf32>
    %309 = math.tanh %308 : vector<2x16xf32>
    %310 = arith.mulf %306, %267 : vector<2x16xf32>
    %311 = arith.mulf %305, %309 : vector<2x16xf32>
    %312 = arith.addf %310, %311 : vector<2x16xf32>
    %313 = math.tanh %312 : vector<2x16xf32>
    %314 = arith.mulf %307, %313 : vector<2x16xf32>
    %315 = arith.index_cast %c6_i32 : i32 to index
    %c0_59 = arith.constant 0 : index
    %c0_60 = arith.constant 0 : index
    %316 = vector.load %arg5[%315, %c0_59, %c0_60] : memref<8x2x16xf32, #tpu.memory_space<vmem>>, vector<1x2x16xf32>
    %317 = vector.shape_cast %316 : vector<1x2x16xf32> to vector<2x16xf32>
    %318 = vector.shape_cast %314 : vector<2x16xf32> to vector<1x2x16xf32>
    tpu.vector_store %arg5[%315, %c0_59, %c0_60], %318 {strides = array<i32>} : memref<8x2x16xf32, #tpu.memory_space<vmem>>, vector<1x2x16xf32>,
    %c7_i32 = arith.constant 7 : i32
    %319 = arith.index_cast %c7_i32 : i32 to index
    %c0_61 = arith.constant 0 : index
    %c0_62 = arith.constant 0 : index
    %320 = vector.load %arg0[%319, %c0_61, %c0_62] : memref<8x2x64xf32, #tpu.memory_space<vmem>>, vector<1x2x64xf32>
    %321 = vector.shape_cast %320 : vector<1x2x64xf32> to vector<2x64xf32>
    %cst_63 = arith.constant dense<0.000000e+00> : vector<2x64xf32>
    %322 = tpu.matmul %294, %0, %cst_63 {dimension_numbers = #tpu.dot_dimension_numbers<[1], [0], [0], [1], [0, 0, 1, 1], [], []>} : vector<2x16xf32>, vector<16x64xf32>, vector<2x64xf32> -> vector<2x64xf32>
    %323 = arith.addf %321, %322 : vector<2x64xf32>
    %324 = vector.extract_strided_slice %323 {offsets = [0, 0], sizes = [2, 48], strides = [1, 1]} : vector<2x64xf32> to vector<2x48xf32>
    %325 = arith.negf %324 : vector<2x48xf32>
    %326 = math.exp %325 : vector<2x48xf32>
    %cst_64 = arith.constant 1.000000e+00 : f32
    %327 = vector.broadcast %cst_64 : f32 to vector<2x48xf32>
    %328 = arith.addf %327, %326 : vector<2x48xf32>
    %329 = arith.divf %327, %328 : vector<2x48xf32>
    %330 = vector.extract_strided_slice %329 {offsets = [0, 0], sizes = [2, 16], strides = [1, 1]} : vector<2x48xf32> to vector<2x16xf32>
    %331 = vector.extract_strided_slice %329 {offsets = [0, 16], sizes = [2, 16], strides = [1, 1]} : vector<2x48xf32> to vector<2x16xf32>
    %332 = vector.extract_strided_slice %329 {offsets = [0, 32], sizes = [2, 16], strides = [1, 1]} : vector<2x48xf32> to vector<2x16xf32>
    %333 = vector.extract_strided_slice %323 {offsets = [0, 48], sizes = [2, 16], strides = [1, 1]} : vector<2x64xf32> to vector<2x16xf32>
    %334 = math.tanh %333 : vector<2x16xf32>
    %335 = arith.mulf %331, %292 : vector<2x16xf32>
    %336 = arith.mulf %330, %334 : vector<2x16xf32>
    %337 = arith.addf %335, %336 : vector<2x16xf32>
    %338 = math.tanh %337 : vector<2x16xf32>
    %339 = arith.mulf %332, %338 : vector<2x16xf32>
    %340 = tpu.concatenate %339, %314 in 1 : vector<2x16xf32>, vector<2x16xf32> -> vector<2x32xf32>
    %cst_65 = arith.constant dense<0.000000e+00> : vector<2x64xf32>
    %341 = tpu.matmul %340, %1, %cst_65 {dimension_numbers = #tpu.dot_dimension_numbers<[1], [0], [0], [1], [0, 0, 1, 1], [], []>} : vector<2x32xf32>, vector<32x64xf32>, vector<2x64xf32> -> vector<2x64xf32>
    %342 = vector.broadcast %2 : vector<1x64xf32> to vector<2x64xf32>
    %343 = arith.addf %341, %342 : vector<2x64xf32>
    %344 = vector.extract_strided_slice %343 {offsets = [0, 0], sizes = [2, 48], strides = [1, 1]} : vector<2x64xf32> to vector<2x48xf32>
    %345 = arith.negf %344 : vector<2x48xf32>
    %346 = math.exp %345 : vector<2x48xf32>
    %cst_66 = arith.constant 1.000000e+00 : f32
    %347 = vector.broadcast %cst_66 : f32 to vector<2x48xf32>
    %348 = arith.addf %347, %346 : vector<2x48xf32>
    %349 = arith.divf %347, %348 : vector<2x48xf32>
    %350 = vector.extract_strided_slice %349 {offsets = [0, 0], sizes = [2, 16], strides = [1, 1]} : vector<2x48xf32> to vector<2x16xf32>
    %351 = vector.extract_strided_slice %349 {offsets = [0, 16], sizes = [2, 16], strides = [1, 1]} : vector<2x48xf32> to vector<2x16xf32>
    %352 = vector.extract_strided_slice %349 {offsets = [0, 32], sizes = [2, 16], strides = [1, 1]} : vector<2x48xf32> to vector<2x16xf32>
    %353 = vector.extract_strided_slice %343 {offsets = [0, 48], sizes = [2, 16], strides = [1, 1]} : vector<2x64xf32> to vector<2x16xf32>
    %354 = math.tanh %353 : vector<2x16xf32>
    %355 = arith.mulf %351, %312 : vector<2x16xf32>
    %356 = arith.mulf %350, %354 : vector<2x16xf32>
    %357 = arith.addf %355, %356 : vector<2x16xf32>
    %358 = math.tanh %357 : vector<2x16xf32>
    %359 = arith.mulf %352, %358 : vector<2x16xf32>
    %360 = arith.index_cast %c7_i32 : i32 to index
    %c0_67 = arith.constant 0 : index
    %c0_68 = arith.constant 0 : index
    %361 = vector.load %arg5[%360, %c0_67, %c0_68] : memref<8x2x16xf32, #tpu.memory_space<vmem>>, vector<1x2x16xf32>
    %362 = vector.shape_cast %361 : vector<1x2x16xf32> to vector<2x16xf32>
    %363 = vector.shape_cast %359 : vector<2x16xf32> to vector<1x2x16xf32>
    tpu.vector_store %arg5[%360, %c0_67, %c0_68], %363 {strides = array<i32>} : memref<8x2x16xf32, #tpu.memory_space<vmem>>, vector<1x2x16xf32>,
    %c8_i32 = arith.constant 8 : i32
    %c0_69 = arith.constant 0 : index
    %c0_70 = arith.constant 0 : index
    %c0_71 = arith.constant 0 : index
    %364 = vector.load %arg5[%c0_69, %c0_70, %c0_71] : memref<8x2x16xf32, #tpu.memory_space<vmem>>, vector<8x2x16xf32>
    %cst_72 = arith.constant dense<0xFF800000> : vector<8x2xf32>
    %365 = vector.multi_reduction <maximumf>, %364, %cst_72 [2] : vector<8x2x16xf32> to vector<8x2xf32>
    %cst_73 = arith.constant 0xFF800000 : f32
    %366 = vector.broadcast %cst_73 : f32 to vector<8x2xf32>
    %367 = arith.maximumf %366, %365 : vector<8x2xf32>
    %368 = vector.shape_cast %367 : vector<8x2xf32> to vector<8x2x1xf32>
    %369 = vector.broadcast %368 : vector<8x2x1xf32> to vector<8x2x16xf32>
    %370 = arith.subf %364, %369 : vector<8x2x16xf32>
    %371 = math.exp %370 : vector<8x2x16xf32>
    %cst_74 = arith.constant dense<0.000000e+00> : vector<8x2xf32>
    %372 = vector.multi_reduction <add>, %371, %cst_74 [2] : vector<8x2x16xf32> to vector<8x2xf32>
    %373 = vector.shape_cast %372 : vector<8x2xf32> to vector<8x2x1xf32>
    %374 = vector.broadcast %373 : vector<8x2x1xf32> to vector<8x2x16xf32>
    %375 = arith.divf %371, %374 : vector<8x2x16xf32>
    %376 = vector.extract_strided_slice %375 {offsets = [0, 0, 1], sizes = [8, 2, 15], strides = [1, 1, 1]} : vector<8x2x16xf32> to vector<8x2x15xf32>
    %c0_75 = arith.constant 0 : index
    %c0_76 = arith.constant 0 : index
    %c0_77 = arith.constant 0 : index
    %377 = vector.load %arg1[%c0_75, %c0_76, %c0_77] : memref<8x2x32xf32, #tpu.memory_space<vmem>>, vector<8x2x32xf32>
    "tpu.trace_start"() <{level = 10 : i32, message = "tbs,tbd->bsd"}> : () -> ()
    %cst_78 = arith.constant dense<0.000000e+00> : vector<2x15x32xf32>
    %378 = tpu.matmul %376, %377, %cst_78 {dimension_numbers = #tpu.dot_dimension_numbers<[0], [0], [2], [2], [0, 1, 0, 2, 1, 2], [1], [1]>} : vector<8x2x15xf32>, vector<8x2x32xf32>, vector<2x15x32xf32> -> vector<2x15x32xf32>
    "tpu.trace_stop"() : () -> ()
    %c0_79 = arith.constant 0 : index
    %c0_80 = arith.constant 0 : index
    %c0_81 = arith.constant 0 : index
    %379 = vector.load %arg6[%c0_79, %c0_80, %c0_81] : memref<2x15x32xf32, #tpu.memory_space<vmem>>, vector<2x15x32xf32>
    tpu.vector_store %arg6[%c0_79, %c0_80, %c0_81], %378 {strides = array<i32>} : memref<2x15x32xf32, #tpu.memory_space<vmem>>, vector<2x15x32xf32>,
    return
  }
}

</mosaic_0001>

<llo_original>
// kernel: tpu_custom_call.1
$region0: #{tpu_custom_call.1}
  #allocation0 [shape = 'u32[]', space=smem, size = 0x4, offset = 0x4, fixed_abs, tag = 'smem constant byte address 0x4 - core index']
  #allocation1 [shape = 'u32[72,128]{1,0:T(1,128)}', space=vmem, size = 0x9000, scoped, tag = 'internal scratch']
  %s0 = inlined_call_operand.hbm [shape: f32[8,2,64], index: 0, kind: input, shape index: {}]
  %s1 = inlined_call_operand.hbm [shape: f32[8,2,32], index: 1, kind: input, shape index: {}]
  %s2 = inlined_call_operand.hbm [shape: f32[16,64], index: 2, kind: input, shape index: {}]
  %s3 = inlined_call_operand.hbm [shape: f32[32,64], index: 3, kind: input, shape index: {}]
  %s4 = inlined_call_operand.vmem [shape: f32[1,64], index: 4, kind: input, shape index: {}]
  %s5 = inlined_call_operand.hbm [shape: f32[8,2,16], index: 5, kind: output, shape index: {0}]
  %s6 = inlined_call_operand.vmem [shape: f32[2,15,32], index: 6, kind: output, shape index: {1}]
  %7 = xla_tuple %s5, %s6
  %s8 = sld [smem:[#allocation0]]
  $region54: #{tpu_custom_call.1} parent=0
    _
  %s10 = ssub.s32 1, %s8
  %s11 = scalar_select 0, %s10, %s8
  $region1: #{tpu_custom_call.1} parent=0
    #allocation2 [shape = 'u8[8192]{0}', space=vmem, size = 0x2000, scoped, tag = 'input window, operand 0, single buffered']
    #allocation3 [shape = 's32[1]{0}', space=sflag, size = 0x4, scoped, tag = 'scoped memory for tpu_custom_call.1']
    #allocation4 [shape = 's32[1]{0}', space=sflag, size = 0x4, scoped, tag = 'scoped memory for tpu_custom_call.1']
    #allocation5 [shape = 'u8[8192]{0}', space=vmem, size = 0x2000, scoped, tag = 'input window, operand 1, single buffered']
    #allocation6 [shape = 's32[1]{0}', space=sflag, size = 0x4, scoped, tag = 'scoped memory for tpu_custom_call.1']
    #allocation7 [shape = 'u8[8192]{0}', space=vmem, size = 0x2000, scoped, tag = 'input window, operand 2, single buffered']
    #allocation8 [shape = 'u8[16384]{0}', space=vmem, size = 0x4000, scoped, tag = 'input window, operand 3, single buffered']
    #allocation9 [shape = 's32[1]{0}', space=sflag, size = 0x4, scoped, tag = 'scoped memory for tpu_custom_call.1']
    #allocation10 [shape = 'u8[8192]{0}', space=vmem, size = 0x2000, scoped, tag = 'output window, operand 0, single buffered']
    %12 = vsyncpa [#allocation3], 0
    %13 = vsyncpa [#allocation6], 0
    %14 = vsyncpa [#allocation9], 0
    %15 = vsyncpa [#allocation4], 0
    // Predicated region
    $region2: #{tpu_custom_call.1} parent=1 // pred_check
      _
    $region3: #{tpu_custom_call.1} parent=1 // pred_check_branch
      %17 = sbr.rel (0) target = $region5
    $region4: #{tpu_custom_call.1} parent=1 // pred_region
      %19 = vsyncadd [#allocation3], 0
      %s20 = sshll.u32 %s0, 4
      %s21 = int_to_ptr.hbm [resolvable:$true] %s20
      %s22 = sshll.u32 [#allocation2], 4
      %s23 = int_to_ptr.vmem [resolvable:$true] %s22
      %28 = dma.hbm_to_vmem [thread:$0]  %s21, 256, %s23, [#allocation3], 32, 32, 2
    $region5: #{tpu_custom_call.1} parent=1 // pred_fallthru
      _
    // Predicated region
    $region6: #{tpu_custom_call.1} parent=1 // pred_check
      _
    $region7: #{tpu_custom_call.1} parent=1 // pred_check_branch
      %30 = sbr.rel (0) target = $region9
    $region8: #{tpu_custom_call.1} parent=1 // pred_region
      %32 = vsyncadd [#allocation6], 0
      %s33 = sshll.u32 %s1, 4
      %s34 = int_to_ptr.hbm [resolvable:$true] %s33
      %s35 = sshll.u32 [#allocation5], 4
      %s36 = int_to_ptr.vmem [resolvable:$true] %s35
      %41 = dma.hbm_to_vmem [thread:$0]  %s34, 256, %s36, [#allocation6], 32, 32, 2
    $region9: #{tpu_custom_call.1} parent=1 // pred_fallthru
      _
    // Predicated region
    $region10: #{tpu_custom_call.1} parent=1 // pred_check
      _
    $region11: #{tpu_custom_call.1} parent=1 // pred_check_branch
      %43 = sbr.rel (0) target = $region13
    $region12: #{tpu_custom_call.1} parent=1 // pred_region
      %45 = vsyncadd [#allocation6], 0
      %s46 = sshll.u32 %s2, 4
      %s47 = int_to_ptr.hbm [resolvable:$true] %s46
      %s48 = sshll.u32 [#allocation7], 4
      %s49 = int_to_ptr.vmem [resolvable:$true] %s48
      %54 = dma.hbm_to_vmem [thread:$0]  %s47, 256, %s49, [#allocation6], 128, 128, 8
    $region13: #{tpu_custom_call.1} parent=1 // pred_fallthru
      _
    // Predicated region
    $region14: #{tpu_custom_call.1} parent=1 // pred_check
      _
    $region15: #{tpu_custom_call.1} parent=1 // pred_check_branch
      %56 = sbr.rel (0) target = $region17
    $region16: #{tpu_custom_call.1} parent=1 // pred_region
      %58 = vsyncadd [#allocation9], 0
      %s59 = sshll.u32 %s3, 4
      %s60 = int_to_ptr.hbm [resolvable:$true] %s59
      %s61 = sshll.u32 [#allocation8], 4
      %s62 = int_to_ptr.vmem [resolvable:$true] %s61
      %67 = dma.hbm_to_vmem [thread:$0]  %s60, 512, %s62, [#allocation9], 128, 128, 8
    $region17: #{tpu_custom_call.1} parent=1 // pred_fallthru
      _
    // Predicated region
    $region18: #{tpu_custom_call.1} parent=1 // pred_check
      _
    $region19: #{tpu_custom_call.1} parent=1 // pred_check_branch
      %69 = sbr.rel (0) target = $region21
    $region20: #{tpu_custom_call.1} parent=1 // pred_region
      _
    $region21: #{tpu_custom_call.1} parent=1 // pred_fallthru
      _
    // Predicated region
    $region22: #{tpu_custom_call.1} parent=1 // pred_check
      _
    $region23: #{tpu_custom_call.1} parent=1 // pred_check_branch
      %71 = sbr.rel (0) target = $region25
    $region24: #{tpu_custom_call.1} parent=1 // pred_region
      %73 = dma.done [#allocation3], 256
    $region25: #{tpu_custom_call.1} parent=1 // pred_fallthru
      _
    // Predicated region
    $region26: #{tpu_custom_call.1} parent=1 // pred_check
      _
    $region27: #{tpu_custom_call.1} parent=1 // pred_check_branch
      %75 = sbr.rel (0) target = $region29
    $region28: #{tpu_custom_call.1} parent=1 // pred_region
      %77 = dma.done [#allocation6], 256
    $region29: #{tpu_custom_call.1} parent=1 // pred_fallthru
      _
    // Predicated region
    $region30: #{tpu_custom_call.1} parent=1 // pred_check
      _
    $region31: #{tpu_custom_call.1} parent=1 // pred_check_branch
      %79 = sbr.rel (0) target = $region33
    $region32: #{tpu_custom_call.1} parent=1 // pred_region
      %81 = dma.done [#allocation6], 256
    $region33: #{tpu_custom_call.1} parent=1 // pred_fallthru
      _
    // Predicated region
    $region34: #{tpu_custom_call.1} parent=1 // pred_check
      _
    $region35: #{tpu_custom_call.1} parent=1 // pred_check_branch
      %83 = sbr.rel (0) target = $region37
    $region36: #{tpu_custom_call.1} parent=1 // pred_region
      %85 = dma.done [#allocation9], 512
    $region37: #{tpu_custom_call.1} parent=1 // pred_fallthru
      _
    %v86 = vld [vmem:[#allocation7] sm:$0xff]
    %v87 = vld [vmem:[#allocation7 + $0x8] sm:$0xff]
    %v88 = vld [vmem:[#allocation8] sm:$0xff]
    %v89 = vld [vmem:[#allocation8 + $0x8] sm:$0xff]
    %v90 = vld [vmem:[#allocation8 + $0x10] sm:$0xff]
    %v91 = vld [vmem:[#allocation8 + $0x18] sm:$0xff]
    %v92 = vld [vmem:[%s4] sm:$0x1]
    %v93 = vld [vmem:[#allocation2] sm:$0x3]
    %vm94 = vcmask 130048
    %v96 = vsel %vm94, 0.0, 0
    %98 = vmatpush.msra.mxu0 0.0
    %99 = vmatpush.msra.mxu0 0.0
    %100 = vmatpush.msra.mxu0 0.0
    %101 = vmatpush.msra.mxu0 0.0
    %102 = vmatpush.msra.mxu0 0.0
    %103 = vmatpush.msra.mxu0 0.0
    %104 = vmatpush.msra.mxu0 0.0
    %105 = vmatpush.msra.mxu0 0.0
    %106 = vmatpush.msra.mxu0 0.0
    %107 = vmatpush.msra.mxu0 0.0
    %108 = vmatpush.msra.mxu0 0.0
    %109 = vmatpush.msra.mxu0 0.0
    %110 = vmatpush.msra.mxu0 0.0
    %111 = vmatpush.msra.mxu0 0.0
    %112 = vmatpush.msra.mxu0 %v87
    %113 = vmatpush.msra.mxu0 %v86
    %114 = vmatmul.f32.gmra.mxu0 %v96
    %v115 = vpop.f32.mrf.mxu0
    %v116 = vadd.f32 0.0, %v115
    %117 = vdwg.mxu0
    %v118 = vadd.f32 %v93, %v116
    %v119 = vxor.u32 %v118, 2147483648
    %v120 = vmul.f32 %v119, 1.442695
    %v121 = vpow.pop %v120
    %v122 = vadd.f32 %v121, 1.0
    %v123 = vrcp.pop %v122
    %v124 = vmul.f32 %v122, %v123
    %v125 = vsub.f32 1.0, %v124
    %v126 = vmul.f32 %v123, %v125
    %v127 = vadd.f32 %v123, %v126
    %vm128 = vweird.f32 %v122
    %vm129 = vweird.f32 %v123
    %vm130 = vmor %vm128, %vm129
    %v131 = vsel %vm130, %v123, %v127
    %v132 = vand.u32 2147483647, %v122
    %vm133 = vcmp.eq.f32.partialorder %v132, 8.507059e+37
    %v134 = vand.u32 %v122, 2147483648
    %v135 = vor.u32 1.1754944e-38, %v134
    %v136 = vsel %vm133, %v135, %v131
    %v137 = vmul.f32 1.0, %v136
    %v138 = vtanh.pop %v118
    %v139 = vmul.f32 %v137, 0.0
    %141 = vrot.lane.b32.xlu0 %v138, 80
    %v142 = vpop.permute.xlu0 %141
    %v144 = vmul.f32 %v137, %v142
    %146 = vrot.lane.b32.xlu0 %v144, 16
    %v147 = vpop.permute.xlu0 %146
    %v149 = vadd.f32 %v139, %v147
    %v150 = vtanh.pop %v149
    %152 = vrot.lane.b32.xlu0 %v150, 16
    %v153 = vpop.permute.xlu0 %152
    %v155 = vmul.f32 %v137, %v153
    %157 = vrot.lane.b32.xlu0 %v155, 96
    %v158 = vpop.permute.xlu0 %157
    %v160 = vsel %vm94, %v158, 0.0
    %v162 = vperm.slane %v92, 0
    %vm164 = vcmask 261120
    %v166 = vsel %vm164, %v160, 0
    %168 = vmatpush.msra.mxu0 0.0
    %169 = vmatpush.msra.mxu0 0.0
    %170 = vmatpush.msra.mxu0 0.0
    %171 = vmatpush.msra.mxu0 0.0
    %172 = vmatpush.msra.mxu0 0.0
    %173 = vmatpush.msra.mxu0 0.0
    %174 = vmatpush.msra.mxu0 0.0
    %175 = vmatpush.msra.mxu0 0.0
    %176 = vmatpush.msra.mxu0 0.0
    %177 = vmatpush.msra.mxu0 0.0
    %178 = vmatpush.msra.mxu0 0.0
    %179 = vmatpush.msra.mxu0 0.0
    %180 = vmatpush.msra.mxu0 %v91
    %181 = vmatpush.msra.mxu0 %v90
    %182 = vmatpush.msra.mxu0 %v89
    %183 = vmatpush.msra.mxu0 %v88
    %184 = vmatmul.f32.gmra.mxu0 %v166
    %v185 = vpop.f32.mrf.mxu0
    %v186 = vadd.f32 %v162, %v185
    %187 = vdwg.mxu0
    %v188 = vxor.u32 %v186, 2147483648
    %v189 = vmul.f32 %v188, 1.442695
    %v190 = vpow.pop %v189
    %v191 = vadd.f32 %v190, 1.0
    %v192 = vrcp.pop %v191
    %v193 = vmul.f32 %v191, %v192
    %v194 = vsub.f32 1.0, %v193
    %v195 = vmul.f32 %v192, %v194
    %v196 = vadd.f32 %v192, %v195
    %vm197 = vweird.f32 %v191
    %vm198 = vweird.f32 %v192
    %vm199 = vmor %vm197, %vm198
    %v200 = vsel %vm199, %v192, %v196
    %v201 = vand.u32 2147483647, %v191
    %vm202 = vcmp.eq.f32.partialorder %v201, 8.507059e+37
    %v203 = vand.u32 %v191, 2147483648
    %v204 = vor.u32 1.1754944e-38, %v203
    %v205 = vsel %vm202, %v204, %v200
    %v206 = vmul.f32 1.0, %v205
    %v207 = vtanh.pop %v186
    %v208 = vmul.f32 %v206, 0.0
    %210 = vrot.lane.b32.xlu0 %v207, 80
    %v211 = vpop.permute.xlu0 %210
    %v213 = vmul.f32 %v206, %v211
    %215 = vrot.lane.b32.xlu0 %v213, 16
    %v216 = vpop.permute.xlu0 %215
    %v218 = vadd.f32 %v208, %v216
    %v219 = vtanh.pop %v218
    %221 = vrot.lane.b32.xlu0 %v219, 16
    %v222 = vpop.permute.xlu0 %221
    %v224 = vmul.f32 %v206, %v222
    %226 = vrot.lane.b32.xlu0 %v224, 96
    %v227 = vpop.permute.xlu0 %226
    %vm229 = vcmask 123904
    %230 = vst.msk [vmem:[#allocation10] sm:$0x3] %vm229, %v227
    %s231 = scalar_lea.vmem [#allocation2], 2
    %v232 = vld [vmem:[%s231] sm:$0x3]
    %v233 = vsel %vm94, %v158, 0
    %235 = vmatpush.msra.mxu0 0.0
    %236 = vmatpush.msra.mxu0 0.0
    %237 = vmatpush.msra.mxu0 0.0
    %238 = vmatpush.msra.mxu0 0.0
    %239 = vmatpush.msra.mxu0 0.0
    %240 = vmatpush.msra.mxu0 0.0
    %241 = vmatpush.msra.mxu0 0.0
    %242 = vmatpush.msra.mxu0 0.0
    %243 = vmatpush.msra.mxu0 0.0
    %244 = vmatpush.msra.mxu0 0.0
    %245 = vmatpush.msra.mxu0 0.0
    %246 = vmatpush.msra.mxu0 0.0
    %247 = vmatpush.msra.mxu0 0.0
    %248 = vmatpush.msra.mxu0 0.0
    %249 = vmatpush.msra.mxu0 %v87
    %250 = vmatpush.msra.mxu0 %v86
    %251 = vmatmul.f32.gmra.mxu0 %v233
    %v252 = vpop.f32.mrf.mxu0
    %v253 = vadd.f32 0.0, %v252
    %254 = vdwg.mxu0
    %v255 = vadd.f32 %v232, %v253
    %v256 = vxor.u32 %v255, 2147483648
    %v257 = vmul.f32 %v256, 1.442695
    %v258 = vpow.pop %v257
    %v259 = vadd.f32 %v258, 1.0
    %v260 = vrcp.pop %v259
    %v261 = vmul.f32 %v259, %v260
    %v262 = vsub.f32 1.0, %v261
    %v263 = vmul.f32 %v260, %v262
    %v264 = vadd.f32 %v260, %v263
    %vm265 = vweird.f32 %v259
    %vm266 = vweird.f32 %v260
    %vm267 = vmor %vm265, %vm266
    %v268 = vsel %vm267, %v260, %v264
    %v269 = vand.u32 2147483647, %v259
    %vm270 = vcmp.eq.f32.partialorder %v269, 8.507059e+37
    %v271 = vand.u32 %v259, 2147483648
    %v272 = vor.u32 1.1754944e-38, %v271
    %v273 = vsel %vm270, %v272, %v268
    %v274 = vmul.f32 1.0, %v273
    %v275 = vtanh.pop %v255
    %v276 = vmul.f32 %v274, %v149
    %278 = vrot.lane.b32.xlu0 %v275, 80
    %v279 = vpop.permute.xlu0 %278
    %v281 = vmul.f32 %v274, %v279
    %283 = vrot.lane.b32.xlu0 %v281, 16
    %v284 = vpop.permute.xlu0 %283
    %v286 = vadd.f32 %v276, %v284
    %v287 = vtanh.pop %v286
    %289 = vrot.lane.b32.xlu0 %v287, 16
    %v290 = vpop.permute.xlu0 %289
    %v292 = vmul.f32 %v274, %v290
    %294 = vrot.lane.b32.xlu0 %v292, 96
    %v295 = vpop.permute.xlu0 %294
    %297 = vrot.lane.b32.xlu0 %v224, 112
    %v298 = vpop.permute.xlu0 %297
    %v300 = vsel %vm94, %v295, %v298
    %v302 = vsel %vm164, %v300, 0
    %304 = vmatpush.msra.mxu0 0.0
    %305 = vmatpush.msra.mxu0 0.0
    %306 = vmatpush.msra.mxu0 0.0
    %307 = vmatpush.msra.mxu0 0.0
    %308 = vmatpush.msra.mxu0 0.0
    %309 = vmatpush.msra.mxu0 0.0
    %310 = vmatpush.msra.mxu0 0.0
    %311 = vmatpush.msra.mxu0 0.0
    %312 = vmatpush.msra.mxu0 0.0
    %313 = vmatpush.msra.mxu0 0.0
    %314 = vmatpush.msra.mxu0 0.0
    %315 = vmatpush.msra.mxu0 0.0
    %316 = vmatpush.msra.mxu0 %v91
    %317 = vmatpush.msra.mxu0 %v90
    %318 = vmatpush.msra.mxu0 %v89
    %319 = vmatpush.msra.mxu0 %v88
    %320 = vmatmul.f32.gmra.mxu0 %v302
    %v321 = vpop.f32.mrf.mxu0
    %v322 = vadd.f32 %v162, %v321
    %323 = vdwg.mxu0
    %v324 = vxor.u32 %v322, 2147483648
    %v325 = vmul.f32 %v324, 1.442695
    %v326 = vpow.pop %v325
    %v327 = vadd.f32 %v326, 1.0
    %v328 = vrcp.pop %v327
    %v329 = vmul.f32 %v327, %v328
    %v330 = vsub.f32 1.0, %v329
    %v331 = vmul.f32 %v328, %v330
    %v332 = vadd.f32 %v328, %v331
    %vm333 = vweird.f32 %v327
    %vm334 = vweird.f32 %v328
    %vm335 = vmor %vm333, %vm334
    %v336 = vsel %vm335, %v328, %v332
    %v337 = vand.u32 2147483647, %v327
    %vm338 = vcmp.eq.f32.partialorder %v337, 8.507059e+37
    %v339 = vand.u32 %v327, 2147483648
    %v340 = vor.u32 1.1754944e-38, %v339
    %v341 = vsel %vm338, %v340, %v336
    %v342 = vmul.f32 1.0, %v341
    %v343 = vtanh.pop %v322
    %v344 = vmul.f32 %v342, %v218
    %346 = vrot.lane.b32.xlu0 %v343, 80
    %v347 = vpop.permute.xlu0 %346
    %v349 = vmul.f32 %v342, %v347
    %351 = vrot.lane.b32.xlu0 %v349, 16
    %v352 = vpop.permute.xlu0 %351
    %v354 = vadd.f32 %v344, %v352
    %v355 = vtanh.pop %v354
    %357 = vrot.lane.b32.xlu0 %v355, 16
    %v358 = vpop.permute.xlu0 %357
    %v360 = vmul.f32 %v342, %v358
    %362 = vrot.lane.b32.xlu0 %v360, 96
    %v363 = vpop.permute.xlu0 %362
    %s365 = scalar_lea.vmem [#allocation10], 2
    %366 = vst.msk [vmem:[%s365] sm:$0x3] %vm229, %v363
    %s367 = scalar_lea.vmem [#allocation2], 4
    %v368 = vld [vmem:[%s367] sm:$0x3]
    %v369 = vsel %vm94, %v295, 0
    %371 = vmatpush.msra.mxu0 0.0
    %372 = vmatpush.msra.mxu0 0.0
    %373 = vmatpush.msra.mxu0 0.0
    %374 = vmatpush.msra.mxu0 0.0
    %375 = vmatpush.msra.mxu0 0.0
    %376 = vmatpush.msra.mxu0 0.0
    %377 = vmatpush.msra.mxu0 0.0
    %378 = vmatpush.msra.mxu0 0.0
    %379 = vmatpush.msra.mxu0 0.0
    %380 = vmatpush.msra.mxu0 0.0
    %381 = vmatpush.msra.mxu0 0.0
    %382 = vmatpush.msra.mxu0 0.0
    %383 = vmatpush.msra.mxu0 0.0
    %384 = vmatpush.msra.mxu0 0.0
    %385 = vmatpush.msra.mxu0 %v87
    %386 = vmatpush.msra.mxu0 %v86
    %387 = vmatmul.f32.gmra.mxu0 %v369
    %v388 = vpop.f32.mrf.mxu0
    %v389 = vadd.f32 0.0, %v388
    %390 = vdwg.mxu0
    %v391 = vadd.f32 %v368, %v389
    %v392 = vxor.u32 %v391, 2147483648
    %v393 = vmul.f32 %v392, 1.442695
    %v394 = vpow.pop %v393
    %v395 = vadd.f32 %v394, 1.0
    %v396 = vrcp.pop %v395
    %v397 = vmul.f32 %v395, %v396
    %v398 = vsub.f32 1.0, %v397
    %v399 = vmul.f32 %v396, %v398
    %v400 = vadd.f32 %v396, %v399
    %vm401 = vweird.f32 %v395
    %vm402 = vweird.f32 %v396
    %vm403 = vmor %vm401, %vm402
    %v404 = vsel %vm403, %v396, %v400
    %v405 = vand.u32 2147483647, %v395
    %vm406 = vcmp.eq.f32.partialorder %v405, 8.507059e+37
    %v407 = vand.u32 %v395, 2147483648
    %v408 = vor.u32 1.1754944e-38, %v407
    %v409 = vsel %vm406, %v408, %v404
    %v410 = vmul.f32 1.0, %v409
    %v411 = vtanh.pop %v391
    %v412 = vmul.f32 %v410, %v286
    %414 = vrot.lane.b32.xlu0 %v411, 80
    %v415 = vpop.permute.xlu0 %414
    %v417 = vmul.f32 %v410, %v415
    %419 = vrot.lane.b32.xlu0 %v417, 16
    %v420 = vpop.permute.xlu0 %419
    %v422 = vadd.f32 %v412, %v420
    %v423 = vtanh.pop %v422
    %425 = vrot.lane.b32.xlu0 %v423, 16
    %v426 = vpop.permute.xlu0 %425
    %v428 = vmul.f32 %v410, %v426
    %430 = vrot.lane.b32.xlu0 %v428, 96
    %v431 = vpop.permute.xlu0 %430
    %433 = vrot.lane.b32.xlu0 %v360, 112
    %v434 = vpop.permute.xlu0 %433
    %v436 = vsel %vm94, %v431, %v434
    %v438 = vsel %vm164, %v436, 0
    %440 = vmatpush.msra.mxu0 0.0
    %441 = vmatpush.msra.mxu0 0.0
    %442 = vmatpush.msra.mxu0 0.0
    %443 = vmatpush.msra.mxu0 0.0
    %444 = vmatpush.msra.mxu0 0.0
    %445 = vmatpush.msra.mxu0 0.0
    %446 = vmatpush.msra.mxu0 0.0
    %447 = vmatpush.msra.mxu0 0.0
    %448 = vmatpush.msra.mxu0 0.0
    %449 = vmatpush.msra.mxu0 0.0
    %450 = vmatpush.msra.mxu0 0.0
    %451 = vmatpush.msra.mxu0 0.0
    %452 = vmatpush.msra.mxu0 %v91
    %453 = vmatpush.msra.mxu0 %v90
    %454 = vmatpush.msra.mxu0 %v89
    %455 = vmatpush.msra.mxu0 %v88
    %456 = vmatmul.f32.gmra.mxu0 %v438
    %v457 = vpop.f32.mrf.mxu0
    %v458 = vadd.f32 %v162, %v457
    %459 = vdwg.mxu0
    %v460 = vxor.u32 %v458, 2147483648
    %v461 = vmul.f32 %v460, 1.442695
    %v462 = vpow.pop %v461
    %v463 = vadd.f32 %v462, 1.0
    %v464 = vrcp.pop %v463
    %v465 = vmul.f32 %v463, %v464
    %v466 = vsub.f32 1.0, %v465
    %v467 = vmul.f32 %v464, %v466
    %v468 = vadd.f32 %v464, %v467
    %vm469 = vweird.f32 %v463
    %vm470 = vweird.f32 %v464
    %vm471 = vmor %vm469, %vm470
    %v472 = vsel %vm471, %v464, %v468
    %v473 = vand.u32 2147483647, %v463
    %vm474 = vcmp.eq.f32.partialorder %v473, 8.507059e+37
    %v475 = vand.u32 %v463, 2147483648
    %v476 = vor.u32 1.1754944e-38, %v475
    %v477 = vsel %vm474, %v476, %v472
    %v478 = vmul.f32 1.0, %v477
    %v479 = vtanh.pop %v458
    %v480 = vmul.f32 %v478, %v354
    %482 = vrot.lane.b32.xlu0 %v479, 80
    %v483 = vpop.permute.xlu0 %482
    %v485 = vmul.f32 %v478, %v483
    %487 = vrot.lane.b32.xlu0 %v485, 16
    %v488 = vpop.permute.xlu0 %487
    %v490 = vadd.f32 %v480, %v488
    %v491 = vtanh.pop %v490
    %493 = vrot.lane.b32.xlu0 %v491, 16
    %v494 = vpop.permute.xlu0 %493
    %v496 = vmul.f32 %v478, %v494
    %498 = vrot.lane.b32.xlu0 %v496, 96
    %v499 = vpop.permute.xlu0 %498
    %s501 = scalar_lea.vmem [#allocation10], 4
    %502 = vst.msk [vmem:[%s501] sm:$0x3] %vm229, %v499
    %s503 = scalar_lea.vmem [#allocation2], 6
    %v504 = vld [vmem:[%s503] sm:$0x3]
    %v505 = vsel %vm94, %v431, 0
    %507 = vmatpush.msra.mxu0 0.0
    %508 = vmatpush.msra.mxu0 0.0
    %509 = vmatpush.msra.mxu0 0.0
    %510 = vmatpush.msra.mxu0 0.0
    %511 = vmatpush.msra.mxu0 0.0
    %512 = vmatpush.msra.mxu0 0.0
    %513 = vmatpush.msra.mxu0 0.0
    %514 = vmatpush.msra.mxu0 0.0
    %515 = vmatpush.msra.mxu0 0.0
    %516 = vmatpush.msra.mxu0 0.0
    %517 = vmatpush.msra.mxu0 0.0
    %518 = vmatpush.msra.mxu0 0.0
    %519 = vmatpush.msra.mxu0 0.0
    %520 = vmatpush.msra.mxu0 0.0
    %521 = vmatpush.msra.mxu0 %v87
    %522 = vmatpush.msra.mxu0 %v86
    %523 = vmatmul.f32.gmra.mxu0 %v505
    %v524 = vpop.f32.mrf.mxu0
    %v525 = vadd.f32 0.0, %v524
    %526 = vdwg.mxu0
    %v527 = vadd.f32 %v504, %v525
    %v528 = vxor.u32 %v527, 2147483648
    %v529 = vmul.f32 %v528, 1.442695
    %v530 = vpow.pop %v529
    %v531 = vadd.f32 %v530, 1.0
    %v532 = vrcp.pop %v531
    %v533 = vmul.f32 %v531, %v532
    %v534 = vsub.f32 1.0, %v533
    %v535 = vmul.f32 %v532, %v534
    %v536 = vadd.f32 %v532, %v535
    %vm537 = vweird.f32 %v531
    %vm538 = vweird.f32 %v532
    %vm539 = vmor %vm537, %vm538
    %v540 = vsel %vm539, %v532, %v536
    %v541 = vand.u32 2147483647, %v531
    %vm542 = vcmp.eq.f32.partialorder %v541, 8.507059e+37
    %v543 = vand.u32 %v531, 2147483648
    %v544 = vor.u32 1.1754944e-38, %v543
    %v545 = vsel %vm542, %v544, %v540
    %v546 = vmul.f32 1.0, %v545
    %v547 = vtanh.pop %v527
    %v548 = vmul.f32 %v546, %v422
    %550 = vrot.lane.b32.xlu0 %v547, 80
    %v551 = vpop.permute.xlu0 %550
    %v553 = vmul.f32 %v546, %v551
    %555 = vrot.lane.b32.xlu0 %v553, 16
    %v556 = vpop.permute.xlu0 %555
    %v558 = vadd.f32 %v548, %v556
    %v559 = vtanh.pop %v558
    %561 = vrot.lane.b32.xlu0 %v559, 16
    %v562 = vpop.permute.xlu0 %561
    %v564 = vmul.f32 %v546, %v562
    %566 = vrot.lane.b32.xlu0 %v564, 96
    %v567 = vpop.permute.xlu0 %566
    %569 = vrot.lane.b32.xlu0 %v496, 112
    %v570 = vpop.permute.xlu0 %569
    %v572 = vsel %vm94, %v567, %v570
    %v574 = vsel %vm164, %v572, 0
    %576 = vmatpush.msra.mxu0 0.0
    %577 = vmatpush.msra.mxu0 0.0
    %578 = vmatpush.msra.mxu0 0.0
    %579 = vmatpush.msra.mxu0 0.0
    %580 = vmatpush.msra.mxu0 0.0
    %581 = vmatpush.msra.mxu0 0.0
    %582 = vmatpush.msra.mxu0 0.0
    %583 = vmatpush.msra.mxu0 0.0
    %584 = vmatpush.msra.mxu0 0.0
    %585 = vmatpush.msra.mxu0 0.0
    %586 = vmatpush.msra.mxu0 0.0
    %587 = vmatpush.msra.mxu0 0.0
    %588 = vmatpush.msra.mxu0 %v91
    %589 = vmatpush.msra.mxu0 %v90
    %590 = vmatpush.msra.mxu0 %v89
    %591 = vmatpush.msra.mxu0 %v88
    %592 = vmatmul.f32.gmra.mxu0 %v574
    %v593 = vpop.f32.mrf.mxu0
    %v594 = vadd.f32 %v162, %v593
    %595 = vdwg.mxu0
    %v596 = vxor.u32 %v594, 2147483648
    %v597 = vmul.f32 %v596, 1.442695
    %v598 = vpow.pop %v597
    %v599 = vadd.f32 %v598, 1.0
    %v600 = vrcp.pop %v599
    %v601 = vmul.f32 %v599, %v600
    %v602 = vsub.f32 1.0, %v601
    %v603 = vmul.f32 %v600, %v602
    %v604 = vadd.f32 %v600, %v603
    %vm605 = vweird.f32 %v599
    %vm606 = vweird.f32 %v600
    %vm607 = vmor %vm605, %vm606
    %v608 = vsel %vm607, %v600, %v604
    %v609 = vand.u32 2147483647, %v599
    %vm610 = vcmp.eq.f32.partialorder %v609, 8.507059e+37
    %v611 = vand.u32 %v599, 2147483648
    %v612 = vor.u32 1.1754944e-38, %v611
    %v613 = vsel %vm610, %v612, %v608
    %v614 = vmul.f32 1.0, %v613
    %v615 = vtanh.pop %v594
    %v616 = vmul.f32 %v614, %v490
    %618 = vrot.lane.b32.xlu0 %v615, 80
    %v619 = vpop.permute.xlu0 %618
    %v621 = vmul.f32 %v614, %v619
    %623 = vrot.lane.b32.xlu0 %v621, 16
    %v624 = vpop.permute.xlu0 %623
    %v626 = vadd.f32 %v616, %v624
    %v627 = vtanh.pop %v626
    %629 = vrot.lane.b32.xlu0 %v627, 16
    %v630 = vpop.permute.xlu0 %629
    %v632 = vmul.f32 %v614, %v630
    %634 = vrot.lane.b32.xlu0 %v632, 96
    %v635 = vpop.permute.xlu0 %634
    %s637 = scalar_lea.vmem [#allocation10], 6
    %638 = vst.msk [vmem:[%s637] sm:$0x3] %vm229, %v635
    %s639 = scalar_lea.vmem [#allocation2], 8
    %v640 = vld [vmem:[%s639] sm:$0x3]
    %v641 = vsel %vm94, %v567, 0
    %643 = vmatpush.msra.mxu0 0.0
    %644 = vmatpush.msra.mxu0 0.0
    %645 = vmatpush.msra.mxu0 0.0
    %646 = vmatpush.msra.mxu0 0.0
    %647 = vmatpush.msra.mxu0 0.0
    %648 = vmatpush.msra.mxu0 0.0
    %649 = vmatpush.msra.mxu0 0.0
    %650 = vmatpush.msra.mxu0 0.0
    %651 = vmatpush.msra.mxu0 0.0
    %652 = vmatpush.msra.mxu0 0.0
    %653 = vmatpush.msra.mxu0 0.0
    %654 = vmatpush.msra.mxu0 0.0
    %655 = vmatpush.msra.mxu0 0.0
    %656 = vmatpush.msra.mxu0 0.0
    %657 = vmatpush.msra.mxu0 %v87
    %658 = vmatpush.msra.mxu0 %v86
    %659 = vmatmul.f32.gmra.mxu0 %v641
    %v660 = vpop.f32.mrf.mxu0
    %v661 = vadd.f32 0.0, %v660
    %662 = vdwg.mxu0
    %v663 = vadd.f32 %v640, %v661
    %v664 = vxor.u32 %v663, 2147483648
    %v665 = vmul.f32 %v664, 1.442695
    %v666 = vpow.pop %v665
    %v667 = vadd.f32 %v666, 1.0
    %v668 = vrcp.pop %v667
    %v669 = vmul.f32 %v667, %v668
    %v670 = vsub.f32 1.0, %v669
    %v671 = vmul.f32 %v668, %v670
    %v672 = vadd.f32 %v668, %v671
    %vm673 = vweird.f32 %v667
    %vm674 = vweird.f32 %v668
    %vm675 = vmor %vm673, %vm674
    %v676 = vsel %vm675, %v668, %v672
    %v677 = vand.u32 2147483647, %v667
    %vm678 = vcmp.eq.f32.partialorder %v677, 8.507059e+37
    %v679 = vand.u32 %v667, 2147483648
    %v680 = vor.u32 1.1754944e-38, %v679
    %v681 = vsel %vm678, %v680, %v676
    %v682 = vmul.f32 1.0, %v681
    %v683 = vtanh.pop %v663
    %v684 = vmul.f32 %v682, %v558
    %686 = vrot.lane.b32.xlu0 %v683, 80
    %v687 = vpop.permute.xlu0 %686
    %v689 = vmul.f32 %v682, %v687
    %691 = vrot.lane.b32.xlu0 %v689, 16
    %v692 = vpop.permute.xlu0 %691
    %v694 = vadd.f32 %v684, %v692
    %v695 = vtanh.pop %v694
    %697 = vrot.lane.b32.xlu0 %v695, 16
    %v698 = vpop.permute.xlu0 %697
    %v700 = vmul.f32 %v682, %v698
    %702 = vrot.lane.b32.xlu0 %v700, 96
    %v703 = vpop.permute.xlu0 %702
    %705 = vrot.lane.b32.xlu0 %v632, 112
    %v706 = vpop.permute.xlu0 %705
    %v708 = vsel %vm94, %v703, %v706
    %v710 = vsel %vm164, %v708, 0
    %712 = vmatpush.msra.mxu0 0.0
    %713 = vmatpush.msra.mxu0 0.0
    %714 = vmatpush.msra.mxu0 0.0
    %715 = vmatpush.msra.mxu0 0.0
    %716 = vmatpush.msra.mxu0 0.0
    %717 = vmatpush.msra.mxu0 0.0
    %718 = vmatpush.msra.mxu0 0.0
    %719 = vmatpush.msra.mxu0 0.0
    %720 = vmatpush.msra.mxu0 0.0
    %721 = vmatpush.msra.mxu0 0.0
    %722 = vmatpush.msra.mxu0 0.0
    %723 = vmatpush.msra.mxu0 0.0
    %724 = vmatpush.msra.mxu0 %v91
    %725 = vmatpush.msra.mxu0 %v90
    %726 = vmatpush.msra.mxu0 %v89
    %727 = vmatpush.msra.mxu0 %v88
    %728 = vmatmul.f32.gmra.mxu0 %v710
    %v729 = vpop.f32.mrf.mxu0
    %v730 = vadd.f32 %v162, %v729
    %731 = vdwg.mxu0
    %v732 = vxor.u32 %v730, 2147483648
    %v733 = vmul.f32 %v732, 1.442695
    %v734 = vpow.pop %v733
    %v735 = vadd.f32 %v734, 1.0
    %v736 = vrcp.pop %v735
    %v737 = vmul.f32 %v735, %v736
    %v738 = vsub.f32 1.0, %v737
    %v739 = vmul.f32 %v736, %v738
    %v740 = vadd.f32 %v736, %v739
    %vm741 = vweird.f32 %v735
    %vm742 = vweird.f32 %v736
    %vm743 = vmor %vm741, %vm742
    %v744 = vsel %vm743, %v736, %v740
    %v745 = vand.u32 2147483647, %v735
    %vm746 = vcmp.eq.f32.partialorder %v745, 8.507059e+37
    %v747 = vand.u32 %v735, 2147483648
    %v748 = vor.u32 1.1754944e-38, %v747
    %v749 = vsel %vm746, %v748, %v744
    %v750 = vmul.f32 1.0, %v749
    %v751 = vtanh.pop %v730
    %v752 = vmul.f32 %v750, %v626
    %754 = vrot.lane.b32.xlu0 %v751, 80
    %v755 = vpop.permute.xlu0 %754
    %v757 = vmul.f32 %v750, %v755
    %759 = vrot.lane.b32.xlu0 %v757, 16
    %v760 = vpop.permute.xlu0 %759
    %v762 = vadd.f32 %v752, %v760
    %v763 = vtanh.pop %v762
    %765 = vrot.lane.b32.xlu0 %v763, 16
    %v766 = vpop.permute.xlu0 %765
    %v768 = vmul.f32 %v750, %v766
    %770 = vrot.lane.b32.xlu0 %v768, 96
    %v771 = vpop.permute.xlu0 %770
    %s773 = scalar_lea.vmem [#allocation10], 8
    %774 = vst.msk [vmem:[%s773] sm:$0x3] %vm229, %v771
    %s775 = scalar_lea.vmem [#allocation2], 10
    %v776 = vld [vmem:[%s775] sm:$0x3]
    %v777 = vsel %vm94, %v703, 0
    %779 = vmatpush.msra.mxu0 0.0
    %780 = vmatpush.msra.mxu0 0.0
    %781 = vmatpush.msra.mxu0 0.0
    %782 = vmatpush.msra.mxu0 0.0
    %783 = vmatpush.msra.mxu0 0.0
    %784 = vmatpush.msra.mxu0 0.0
    %785 = vmatpush.msra.mxu0 0.0
    %786 = vmatpush.msra.mxu0 0.0
    %787 = vmatpush.msra.mxu0 0.0
    %788 = vmatpush.msra.mxu0 0.0
    %789 = vmatpush.msra.mxu0 0.0
    %790 = vmatpush.msra.mxu0 0.0
    %791 = vmatpush.msra.mxu0 0.0
    %792 = vmatpush.msra.mxu0 0.0
    %793 = vmatpush.msra.mxu0 %v87
    %794 = vmatpush.msra.mxu0 %v86
    %795 = vmatmul.f32.gmra.mxu0 %v777
    %v796 = vpop.f32.mrf.mxu0
    %v797 = vadd.f32 0.0, %v796
    %798 = vdwg.mxu0
    %v799 = vadd.f32 %v776, %v797
    %v800 = vxor.u32 %v799, 2147483648
    %v801 = vmul.f32 %v800, 1.442695
    %v802 = vpow.pop %v801
    %v803 = vadd.f32 %v802, 1.0
    %v804 = vrcp.pop %v803
    %v805 = vmul.f32 %v803, %v804
    %v806 = vsub.f32 1.0, %v805
    %v807 = vmul.f32 %v804, %v806
    %v808 = vadd.f32 %v804, %v807
    %vm809 = vweird.f32 %v803
    %vm810 = vweird.f32 %v804
    %vm811 = vmor %vm809, %vm810
    %v812 = vsel %vm811, %v804, %v808
    %v813 = vand.u32 2147483647, %v803
    %vm814 = vcmp.eq.f32.partialorder %v813, 8.507059e+37
    %v815 = vand.u32 %v803, 2147483648
    %v816 = vor.u32 1.1754944e-38, %v815
    %v817 = vsel %vm814, %v816, %v812
    %v818 = vmul.f32 1.0, %v817
    %v819 = vtanh.pop %v799
    %v820 = vmul.f32 %v818, %v694
    %822 = vrot.lane.b32.xlu0 %v819, 80
    %v823 = vpop.permute.xlu0 %822
    %v825 = vmul.f32 %v818, %v823
    %827 = vrot.lane.b32.xlu0 %v825, 16
    %v828 = vpop.permute.xlu0 %827
    %v830 = vadd.f32 %v820, %v828
    %v831 = vtanh.pop %v830
    %833 = vrot.lane.b32.xlu0 %v831, 16
    %v834 = vpop.permute.xlu0 %833
    %v836 = vmul.f32 %v818, %v834
    %838 = vrot.lane.b32.xlu0 %v836, 96
    %v839 = vpop.permute.xlu0 %838
    %841 = vrot.lane.b32.xlu0 %v768, 112
    %v842 = vpop.permute.xlu0 %841
    %v844 = vsel %vm94, %v839, %v842
    %v846 = vsel %vm164, %v844, 0
    %848 = vmatpush.msra.mxu0 0.0
    %849 = vmatpush.msra.mxu0 0.0
    %850 = vmatpush.msra.mxu0 0.0
    %851 = vmatpush.msra.mxu0 0.0
    %852 = vmatpush.msra.mxu0 0.0
    %853 = vmatpush.msra.mxu0 0.0
    %854 = vmatpush.msra.mxu0 0.0
    %855 = vmatpush.msra.mxu0 0.0
    %856 = vmatpush.msra.mxu0 0.0
    %857 = vmatpush.msra.mxu0 0.0
    %858 = vmatpush.msra.mxu0 0.0
    %859 = vmatpush.msra.mxu0 0.0
    %860 = vmatpush.msra.mxu0 %v91
    %861 = vmatpush.msra.mxu0 %v90
    %862 = vmatpush.msra.mxu0 %v89
    %863 = vmatpush.msra.mxu0 %v88
    %864 = vmatmul.f32.gmra.mxu0 %v846
    %v865 = vpop.f32.mrf.mxu0
    %v866 = vadd.f32 %v162, %v865
    %867 = vdwg.mxu0
    %v868 = vxor.u32 %v866, 2147483648
    %v869 = vmul.f32 %v868, 1.442695
    %v870 = vpow.pop %v869
    %v871 = vadd.f32 %v870, 1.0
    %v872 = vrcp.pop %v871
    %v873 = vmul.f32 %v871, %v872
    %v874 = vsub.f32 1.0, %v873
    %v875 = vmul.f32 %v872, %v874
    %v876 = vadd.f32 %v872, %v875
    %vm877 = vweird.f32 %v871
    %vm878 = vweird.f32 %v872
    %vm879 = vmor %vm877, %vm878
    %v880 = vsel %vm879, %v872, %v876
    %v881 = vand.u32 2147483647, %v871
    %vm882 = vcmp.eq.f32.partialorder %v881, 8.507059e+37
    %v883 = vand.u32 %v871, 2147483648
    %v884 = vor.u32 1.1754944e-38, %v883
    %v885 = vsel %vm882, %v884, %v880
    %v886 = vmul.f32 1.0, %v885
    %v887 = vtanh.pop %v866
    %v888 = vmul.f32 %v886, %v762
    %890 = vrot.lane.b32.xlu0 %v887, 80
    %v891 = vpop.permute.xlu0 %890
    %v893 = vmul.f32 %v886, %v891
    %895 = vrot.lane.b32.xlu0 %v893, 16
    %v896 = vpop.permute.xlu0 %895
    %v898 = vadd.f32 %v888, %v896
    %v899 = vtanh.pop %v898
    %901 = vrot.lane.b32.xlu0 %v899, 16
    %v902 = vpop.permute.xlu0 %901
    %v904 = vmul.f32 %v886, %v902
    %906 = vrot.lane.b32.xlu0 %v904, 96
    %v907 = vpop.permute.xlu0 %906
    %s909 = scalar_lea.vmem [#allocation10], 10
    %910 = vst.msk [vmem:[%s909] sm:$0x3] %vm229, %v907
    %s911 = scalar_lea.vmem [#allocation2], 12
    %v912 = vld [vmem:[%s911] sm:$0x3]
    %v913 = vsel %vm94, %v839, 0
    %915 = vmatpush.msra.mxu0 0.0
    %916 = vmatpush.msra.mxu0 0.0
    %917 = vmatpush.msra.mxu0 0.0
    %918 = vmatpush.msra.mxu0 0.0
    %919 = vmatpush.msra.mxu0 0.0
    %920 = vmatpush.msra.mxu0 0.0
    %921 = vmatpush.msra.mxu0 0.0
    %922 = vmatpush.msra.mxu0 0.0
    %923 = vmatpush.msra.mxu0 0.0
    %924 = vmatpush.msra.mxu0 0.0
    %925 = vmatpush.msra.mxu0 0.0
    %926 = vmatpush.msra.mxu0 0.0
    %927 = vmatpush.msra.mxu0 0.0
    %928 = vmatpush.msra.mxu0 0.0
    %929 = vmatpush.msra.mxu0 %v87
    %930 = vmatpush.msra.mxu0 %v86
    %931 = vmatmul.f32.gmra.mxu0 %v913
    %v932 = vpop.f32.mrf.mxu0
    %v933 = vadd.f32 0.0, %v932
    %934 = vdwg.mxu0
    %v935 = vadd.f32 %v912, %v933
    %v936 = vxor.u32 %v935, 2147483648
    %v937 = vmul.f32 %v936, 1.442695
    %v938 = vpow.pop %v937
    %v939 = vadd.f32 %v938, 1.0
    %v940 = vrcp.pop %v939
    %v941 = vmul.f32 %v939, %v940
    %v942 = vsub.f32 1.0, %v941
    %v943 = vmul.f32 %v940, %v942
    %v944 = vadd.f32 %v940, %v943
    %vm945 = vweird.f32 %v939
    %vm946 = vweird.f32 %v940
    %vm947 = vmor %vm945, %vm946
    %v948 = vsel %vm947, %v940, %v944
    %v949 = vand.u32 2147483647, %v939
    %vm950 = vcmp.eq.f32.partialorder %v949, 8.507059e+37
    %v951 = vand.u32 %v939, 2147483648
    %v952 = vor.u32 1.1754944e-38, %v951
    %v953 = vsel %vm950, %v952, %v948
    %v954 = vmul.f32 1.0, %v953
    %v955 = vtanh.pop %v935
    %v956 = vmul.f32 %v954, %v830
    %958 = vrot.lane.b32.xlu0 %v955, 80
    %v959 = vpop.permute.xlu0 %958
    %v961 = vmul.f32 %v954, %v959
    %963 = vrot.lane.b32.xlu0 %v961, 16
    %v964 = vpop.permute.xlu0 %963
    %v966 = vadd.f32 %v956, %v964
    %v967 = vtanh.pop %v966
    %969 = vrot.lane.b32.xlu0 %v967, 16
    %v970 = vpop.permute.xlu0 %969
    %v972 = vmul.f32 %v954, %v970
    %974 = vrot.lane.b32.xlu0 %v972, 96
    %v975 = vpop.permute.xlu0 %974
    %977 = vrot.lane.b32.xlu0 %v904, 112
    %v978 = vpop.permute.xlu0 %977
    %v980 = vsel %vm94, %v975, %v978
    %v982 = vsel %vm164, %v980, 0
    %984 = vmatpush.msra.mxu0 0.0
    %985 = vmatpush.msra.mxu0 0.0
    %986 = vmatpush.msra.mxu0 0.0
    %987 = vmatpush.msra.mxu0 0.0
    %988 = vmatpush.msra.mxu0 0.0
    %989 = vmatpush.msra.mxu0 0.0
    %990 = vmatpush.msra.mxu0 0.0
    %991 = vmatpush.msra.mxu0 0.0
    %992 = vmatpush.msra.mxu0 0.0
    %993 = vmatpush.msra.mxu0 0.0
    %994 = vmatpush.msra.mxu0 0.0
    %995 = vmatpush.msra.mxu0 0.0
    %996 = vmatpush.msra.mxu0 %v91
    %997 = vmatpush.msra.mxu0 %v90
    %998 = vmatpush.msra.mxu0 %v89
    %999 = vmatpush.msra.mxu0 %v88
    %1000 = vmatmul.f32.gmra.mxu0 %v982
    %v1001 = vpop.f32.mrf.mxu0
    %v1002 = vadd.f32 %v162, %v1001
    %1003 = vdwg.mxu0
    %v1004 = vxor.u32 %v1002, 2147483648
    %v1005 = vmul.f32 %v1004, 1.442695
    %v1006 = vpow.pop %v1005
    %v1007 = vadd.f32 %v1006, 1.0
    %v1008 = vrcp.pop %v1007
    %v1009 = vmul.f32 %v1007, %v1008
    %v1010 = vsub.f32 1.0, %v1009
    %v1011 = vmul.f32 %v1008, %v1010
    %v1012 = vadd.f32 %v1008, %v1011
    %vm1013 = vweird.f32 %v1007
    %vm1014 = vweird.f32 %v1008
    %vm1015 = vmor %vm1013, %vm1014
    %v1016 = vsel %vm1015, %v1008, %v1012
    %v1017 = vand.u32 2147483647, %v1007
    %vm1018 = vcmp.eq.f32.partialorder %v1017, 8.507059e+37
    %v1019 = vand.u32 %v1007, 2147483648
    %v1020 = vor.u32 1.1754944e-38, %v1019
    %v1021 = vsel %vm1018, %v1020, %v1016
    %v1022 = vmul.f32 1.0, %v1021
    %v1023 = vtanh.pop %v1002
    %v1024 = vmul.f32 %v1022, %v898
    %1026 = vrot.lane.b32.xlu0 %v1023, 80
    %v1027 = vpop.permute.xlu0 %1026
    %v1029 = vmul.f32 %v1022, %v1027
    %1031 = vrot.lane.b32.xlu0 %v1029, 16
    %v1032 = vpop.permute.xlu0 %1031
    %v1034 = vadd.f32 %v1024, %v1032
    %v1035 = vtanh.pop %v1034
    %1037 = vrot.lane.b32.xlu0 %v1035, 16
    %v1038 = vpop.permute.xlu0 %1037
    %v1040 = vmul.f32 %v1022, %v1038
    %1042 = vrot.lane.b32.xlu0 %v1040, 96
    %v1043 = vpop.permute.xlu0 %1042
    %s1045 = scalar_lea.vmem [#allocation10], 12
    %1046 = vst.msk [vmem:[%s1045] sm:$0x3] %vm229, %v1043
    %s1047 = scalar_lea.vmem [#allocation2], 14
    %v1048 = vld [vmem:[%s1047] sm:$0x3]
    %v1049 = vsel %vm94, %v975, 0
    %1051 = vmatpush.msra.mxu0 0.0
    %1052 = vmatpush.msra.mxu0 0.0
    %1053 = vmatpush.msra.mxu0 0.0
    %1054 = vmatpush.msra.mxu0 0.0
    %1055 = vmatpush.msra.mxu0 0.0
    %1056 = vmatpush.msra.mxu0 0.0
    %1057 = vmatpush.msra.mxu0 0.0
    %1058 = vmatpush.msra.mxu0 0.0
    %1059 = vmatpush.msra.mxu0 0.0
    %1060 = vmatpush.msra.mxu0 0.0
    %1061 = vmatpush.msra.mxu0 0.0
    %1062 = vmatpush.msra.mxu0 0.0
    %1063 = vmatpush.msra.mxu0 0.0
    %1064 = vmatpush.msra.mxu0 0.0
    %1065 = vmatpush.msra.mxu0 %v87
    %1066 = vmatpush.msra.mxu0 %v86
    %1067 = vmatmul.f32.gmra.mxu0 %v1049
    %v1068 = vpop.f32.mrf.mxu0
    %v1069 = vadd.f32 0.0, %v1068
    %1070 = vdwg.mxu0
    %v1071 = vadd.f32 %v1048, %v1069
    %v1072 = vxor.u32 %v1071, 2147483648
    %v1073 = vmul.f32 %v1072, 1.442695
    %v1074 = vpow.pop %v1073
    %v1075 = vadd.f32 %v1074, 1.0
    %v1076 = vrcp.pop %v1075
    %v1077 = vmul.f32 %v1075, %v1076
    %v1078 = vsub.f32 1.0, %v1077
    %v1079 = vmul.f32 %v1076, %v1078
    %v1080 = vadd.f32 %v1076, %v1079
    %vm1081 = vweird.f32 %v1075
    %vm1082 = vweird.f32 %v1076
    %vm1083 = vmor %vm1081, %vm1082
    %v1084 = vsel %vm1083, %v1076, %v1080
    %v1085 = vand.u32 2147483647, %v1075
    %vm1086 = vcmp.eq.f32.partialorder %v1085, 8.507059e+37
    %v1087 = vand.u32 %v1075, 2147483648
    %v1088 = vor.u32 1.1754944e-38, %v1087
    %v1089 = vsel %vm1086, %v1088, %v1084
    %v1090 = vmul.f32 1.0, %v1089
    %v1091 = vtanh.pop %v1071
    %v1092 = vmul.f32 %v1090, %v966
    %1094 = vrot.lane.b32.xlu0 %v1091, 80
    %v1095 = vpop.permute.xlu0 %1094
    %v1097 = vmul.f32 %v1090, %v1095
    %1099 = vrot.lane.b32.xlu0 %v1097, 16
    %v1100 = vpop.permute.xlu0 %1099
    %v1102 = vadd.f32 %v1092, %v1100
    %v1103 = vtanh.pop %v1102
    %1105 = vrot.lane.b32.xlu0 %v1103, 16
    %v1106 = vpop.permute.xlu0 %1105
    %v1108 = vmul.f32 %v1090, %v1106
    %1110 = vrot.lane.b32.xlu0 %v1108, 96
    %v1111 = vpop.permute.xlu0 %1110
    %1113 = vrot.lane.b32.xlu0 %v1040, 112
    %v1114 = vpop.permute.xlu0 %1113
    %v1116 = vsel %vm94, %v1111, %v1114
    %v1118 = vsel %vm164, %v1116, 0
    %1120 = vmatpush.msra.mxu0 0.0
    %1121 = vmatpush.msra.mxu0 0.0
    %1122 = vmatpush.msra.mxu0 0.0
    %1123 = vmatpush.msra.mxu0 0.0
    %1124 = vmatpush.msra.mxu0 0.0
    %1125 = vmatpush.msra.mxu0 0.0
    %1126 = vmatpush.msra.mxu0 0.0
    %1127 = vmatpush.msra.mxu0 0.0
    %1128 = vmatpush.msra.mxu0 0.0
    %1129 = vmatpush.msra.mxu0 0.0
    %1130 = vmatpush.msra.mxu0 0.0
    %1131 = vmatpush.msra.mxu0 0.0
    %1132 = vmatpush.msra.mxu0 %v91
    %1133 = vmatpush.msra.mxu0 %v90
    %1134 = vmatpush.msra.mxu0 %v89
    %1135 = vmatpush.msra.mxu0 %v88
    %1136 = vmatmul.f32.gmra.mxu0 %v1118
    %v1137 = vpop.f32.mrf.mxu0
    %v1138 = vadd.f32 %v162, %v1137
    %1139 = vdwg.mxu0
    %v1140 = vxor.u32 %v1138, 2147483648
    %v1141 = vmul.f32 %v1140, 1.442695
    %v1142 = vpow.pop %v1141
    %v1143 = vadd.f32 %v1142, 1.0
    %v1144 = vrcp.pop %v1143
    %v1145 = vmul.f32 %v1143, %v1144
    %v1146 = vsub.f32 1.0, %v1145
    %v1147 = vmul.f32 %v1144, %v1146
    %v1148 = vadd.f32 %v1144, %v1147
    %vm1149 = vweird.f32 %v1143
    %vm1150 = vweird.f32 %v1144
    %vm1151 = vmor %vm1149, %vm1150
    %v1152 = vsel %vm1151, %v1144, %v1148
    %v1153 = vand.u32 2147483647, %v1143
    %vm1154 = vcmp.eq.f32.partialorder %v1153, 8.507059e+37
    %v1155 = vand.u32 %v1143, 2147483648
    %v1156 = vor.u32 1.1754944e-38, %v1155
    %v1157 = vsel %vm1154, %v1156, %v1152
    %v1158 = vmul.f32 1.0, %v1157
    %v1159 = vtanh.pop %v1138
    %v1160 = vmul.f32 %v1158, %v1034
    %1162 = vrot.lane.b32.xlu0 %v1159, 80
    %v1163 = vpop.permute.xlu0 %1162
    %v1165 = vmul.f32 %v1158, %v1163
    %1167 = vrot.lane.b32.xlu0 %v1165, 16
    %v1168 = vpop.permute.xlu0 %1167
    %v1170 = vadd.f32 %v1160, %v1168
    %v1171 = vtanh.pop %v1170
    %1173 = vrot.lane.b32.xlu0 %v1171, 16
    %v1174 = vpop.permute.xlu0 %1173
    %v1176 = vmul.f32 %v1158, %v1174
    %1178 = vrot.lane.b32.xlu0 %v1176, 96
    %v1179 = vpop.permute.xlu0 %1178
    %s1181 = scalar_lea.vmem [#allocation10], 14
    %1182 = vst.msk [vmem:[%s1181] sm:$0x3] %vm229, %v1179
    %v1183 = vld [vmem:[#allocation10] sm:$0x3]
    %v1184 = vld [vmem:[#allocation10 + $0x2] sm:$0x3]
    %v1185 = vld [vmem:[#allocation10 + $0x4] sm:$0x3]
    %v1186 = vld [vmem:[#allocation10 + $0x6] sm:$0x3]
    %v1187 = vld [vmem:[#allocation10 + $0x8] sm:$0x3]
    %v1188 = vld [vmem:[#allocation10 + $0xa] sm:$0x3]
    %v1189 = vld [vmem:[#allocation10 + $0xc] sm:$0x3]
    %v1190 = vld [vmem:[#allocation10 + $0xe] sm:$0x3]
    %v1191 = vsel %vm229, %v1183, -inf
    %1192 = vmax.xlane.f32.xlu0 %v1191
    %v1193 = vpop.xlane.xlu0 %1192
    %v1194 = vsel %vm229, %v1184, -inf
    %1195 = vmax.xlane.f32.xlu0 %v1194
    %v1196 = vpop.xlane.xlu0 %1195
    %v1197 = vsel %vm229, %v1185, -inf
    %1198 = vmax.xlane.f32.xlu0 %v1197
    %v1199 = vpop.xlane.xlu0 %1198
    %v1200 = vsel %vm229, %v1186, -inf
    %1201 = vmax.xlane.f32.xlu0 %v1200
    %v1202 = vpop.xlane.xlu0 %1201
    %v1203 = vsel %vm229, %v1187, -inf
    %1204 = vmax.xlane.f32.xlu0 %v1203
    %v1205 = vpop.xlane.xlu0 %1204
    %v1206 = vsel %vm229, %v1188, -inf
    %1207 = vmax.xlane.f32.xlu0 %v1206
    %v1208 = vpop.xlane.xlu0 %1207
    %v1209 = vsel %vm229, %v1189, -inf
    %1210 = vmax.xlane.f32.xlu0 %v1209
    %v1211 = vpop.xlane.xlu0 %1210
    %v1212 = vsel %vm229, %v1190, -inf
    %1213 = vmax.xlane.f32.xlu0 %v1212
    %v1214 = vpop.xlane.xlu0 %1213
    %v1215 = vsub.f32 %v1183, %v1193
    %v1216 = vsub.f32 %v1184, %v1196
    %v1217 = vsub.f32 %v1185, %v1199
    %v1218 = vsub.f32 %v1186, %v1202
    %v1219 = vsub.f32 %v1187, %v1205
    %v1220 = vsub.f32 %v1188, %v1208
    %v1221 = vsub.f32 %v1189, %v1211
    %v1222 = vsub.f32 %v1190, %v1214
    %v1223 = vmul.f32 %v1215, 1.442695
    %v1224 = vpow.pop %v1223
    %v1225 = vmul.f32 %v1216, 1.442695
    %v1226 = vpow.pop %v1225
    %v1227 = vmul.f32 %v1217, 1.442695
    %v1228 = vpow.pop %v1227
    %v1229 = vmul.f32 %v1218, 1.442695
    %v1230 = vpow.pop %v1229
    %v1231 = vmul.f32 %v1219, 1.442695
    %v1232 = vpow.pop %v1231
    %v1233 = vmul.f32 %v1220, 1.442695
    %v1234 = vpow.pop %v1233
    %v1235 = vmul.f32 %v1221, 1.442695
    %v1236 = vpow.pop %v1235
    %v1237 = vmul.f32 %v1222, 1.442695
    %v1238 = vpow.pop %v1237
    %v1239 = vsel %vm229, %v1224, 0.0
    %1240 = vadd.xlane.f32.xlu0 %v1239
    %v1241 = vpop.xlane.xlu0 %1240
    %v1242 = vsel %vm229, %v1226, 0.0
    %1243 = vadd.xlane.f32.xlu0 %v1242
    %v1244 = vpop.xlane.xlu0 %1243
    %v1245 = vsel %vm229, %v1228, 0.0
    %1246 = vadd.xlane.f32.xlu0 %v1245
    %v1247 = vpop.xlane.xlu0 %1246
    %v1248 = vsel %vm229, %v1230, 0.0
    %1249 = vadd.xlane.f32.xlu0 %v1248
    %v1250 = vpop.xlane.xlu0 %1249
    %v1251 = vsel %vm229, %v1232, 0.0
    %1252 = vadd.xlane.f32.xlu0 %v1251
    %v1253 = vpop.xlane.xlu0 %1252
    %v1254 = vsel %vm229, %v1234, 0.0
    %1255 = vadd.xlane.f32.xlu0 %v1254
    %v1256 = vpop.xlane.xlu0 %1255
    %v1257 = vsel %vm229, %v1236, 0.0
    %1258 = vadd.xlane.f32.xlu0 %v1257
    %v1259 = vpop.xlane.xlu0 %1258
    %v1260 = vsel %vm229, %v1238, 0.0
    %1261 = vadd.xlane.f32.xlu0 %v1260
    %v1262 = vpop.xlane.xlu0 %1261
    %v1263 = vrcp.pop %v1241
    %v1264 = vmul.f32 %v1241, %v1263
    %v1265 = vsub.f32 1.0, %v1264
    %v1266 = vmul.f32 %v1263, %v1265
    %v1267 = vadd.f32 %v1263, %v1266
    %vm1268 = vweird.f32 %v1241
    %vm1269 = vweird.f32 %v1263
    %vm1270 = vmor %vm1268, %vm1269
    %v1271 = vsel %vm1270, %v1263, %v1267
    %v1272 = vand.u32 2147483647, %v1241
    %vm1273 = vcmp.eq.f32.partialorder %v1272, 8.507059e+37
    %v1274 = vand.u32 %v1241, 2147483648
    %v1275 = vor.u32 1.1754944e-38, %v1274
    %v1276 = vsel %vm1273, %v1275, %v1271
    %v1277 = vmul.f32 %v1224, %v1276
    %v1278 = vrcp.pop %v1244
    %v1279 = vmul.f32 %v1244, %v1278
    %v1280 = vsub.f32 1.0, %v1279
    %v1281 = vmul.f32 %v1278, %v1280
    %v1282 = vadd.f32 %v1278, %v1281
    %vm1283 = vweird.f32 %v1244
    %vm1284 = vweird.f32 %v1278
    %vm1285 = vmor %vm1283, %vm1284
    %v1286 = vsel %vm1285, %v1278, %v1282
    %v1287 = vand.u32 2147483647, %v1244
    %vm1288 = vcmp.eq.f32.partialorder %v1287, 8.507059e+37
    %v1289 = vand.u32 %v1244, 2147483648
    %v1290 = vor.u32 1.1754944e-38, %v1289
    %v1291 = vsel %vm1288, %v1290, %v1286
    %v1292 = vmul.f32 %v1226, %v1291
    %v1293 = vrcp.pop %v1247
    %v1294 = vmul.f32 %v1247, %v1293
    %v1295 = vsub.f32 1.0, %v1294
    %v1296 = vmul.f32 %v1293, %v1295
    %v1297 = vadd.f32 %v1293, %v1296
    %vm1298 = vweird.f32 %v1247
    %vm1299 = vweird.f32 %v1293
    %vm1300 = vmor %vm1298, %vm1299
    %v1301 = vsel %vm1300, %v1293, %v1297
    %v1302 = vand.u32 2147483647, %v1247
    %vm1303 = vcmp.eq.f32.partialorder %v1302, 8.507059e+37
    %v1304 = vand.u32 %v1247, 2147483648
    %v1305 = vor.u32 1.1754944e-38, %v1304
    %v1306 = vsel %vm1303, %v1305, %v1301
    %v1307 = vmul.f32 %v1228, %v1306
    %v1308 = vrcp.pop %v1250
    %v1309 = vmul.f32 %v1250, %v1308
    %v1310 = vsub.f32 1.0, %v1309
    %v1311 = vmul.f32 %v1308, %v1310
    %v1312 = vadd.f32 %v1308, %v1311
    %vm1313 = vweird.f32 %v1250
    %vm1314 = vweird.f32 %v1308
    %vm1315 = vmor %vm1313, %vm1314
    %v1316 = vsel %vm1315, %v1308, %v1312
    %v1317 = vand.u32 2147483647, %v1250
    %vm1318 = vcmp.eq.f32.partialorder %v1317, 8.507059e+37
    %v1319 = vand.u32 %v1250, 2147483648
    %v1320 = vor.u32 1.1754944e-38, %v1319
    %v1321 = vsel %vm1318, %v1320, %v1316
    %v1322 = vmul.f32 %v1230, %v1321
    %v1323 = vrcp.pop %v1253
    %v1324 = vmul.f32 %v1253, %v1323
    %v1325 = vsub.f32 1.0, %v1324
    %v1326 = vmul.f32 %v1323, %v1325
    %v1327 = vadd.f32 %v1323, %v1326
    %vm1328 = vweird.f32 %v1253
    %vm1329 = vweird.f32 %v1323
    %vm1330 = vmor %vm1328, %vm1329
    %v1331 = vsel %vm1330, %v1323, %v1327
    %v1332 = vand.u32 2147483647, %v1253
    %vm1333 = vcmp.eq.f32.partialorder %v1332, 8.507059e+37
    %v1334 = vand.u32 %v1253, 2147483648
    %v1335 = vor.u32 1.1754944e-38, %v1334
    %v1336 = vsel %vm1333, %v1335, %v1331
    %v1337 = vmul.f32 %v1232, %v1336
    %v1338 = vrcp.pop %v1256
    %v1339 = vmul.f32 %v1256, %v1338
    %v1340 = vsub.f32 1.0, %v1339
    %v1341 = vmul.f32 %v1338, %v1340
    %v1342 = vadd.f32 %v1338, %v1341
    %vm1343 = vweird.f32 %v1256
    %vm1344 = vweird.f32 %v1338
    %vm1345 = vmor %vm1343, %vm1344
    %v1346 = vsel %vm1345, %v1338, %v1342
    %v1347 = vand.u32 2147483647, %v1256
    %vm1348 = vcmp.eq.f32.partialorder %v1347, 8.507059e+37
    %v1349 = vand.u32 %v1256, 2147483648
    %v1350 = vor.u32 1.1754944e-38, %v1349
    %v1351 = vsel %vm1348, %v1350, %v1346
    %v1352 = vmul.f32 %v1234, %v1351
    %v1353 = vrcp.pop %v1259
    %v1354 = vmul.f32 %v1259, %v1353
    %v1355 = vsub.f32 1.0, %v1354
    %v1356 = vmul.f32 %v1353, %v1355
    %v1357 = vadd.f32 %v1353, %v1356
    %vm1358 = vweird.f32 %v1259
    %vm1359 = vweird.f32 %v1353
    %vm1360 = vmor %vm1358, %vm1359
    %v1361 = vsel %vm1360, %v1353, %v1357
    %v1362 = vand.u32 2147483647, %v1259
    %vm1363 = vcmp.eq.f32.partialorder %v1362, 8.507059e+37
    %v1364 = vand.u32 %v1259, 2147483648
    %v1365 = vor.u32 1.1754944e-38, %v1364
    %v1366 = vsel %vm1363, %v1365, %v1361
    %v1367 = vmul.f32 %v1236, %v1366
    %v1368 = vrcp.pop %v1262
    %v1369 = vmul.f32 %v1262, %v1368
    %v1370 = vsub.f32 1.0, %v1369
    %v1371 = vmul.f32 %v1368, %v1370
    %v1372 = vadd.f32 %v1368, %v1371
    %vm1373 = vweird.f32 %v1262
    %vm1374 = vweird.f32 %v1368
    %vm1375 = vmor %vm1373, %vm1374
    %v1376 = vsel %vm1375, %v1368, %v1372
    %v1377 = vand.u32 2147483647, %v1262
    %vm1378 = vcmp.eq.f32.partialorder %v1377, 8.507059e+37
    %v1379 = vand.u32 %v1262, 2147483648
    %v1380 = vor.u32 1.1754944e-38, %v1379
    %v1381 = vsel %vm1378, %v1380, %v1376
    %v1382 = vmul.f32 %v1238, %v1381
    %v1383 = vld [vmem:[#allocation5] sm:$0x3]
    %v1384 = vld [vmem:[#allocation5 + $0x2] sm:$0x3]
    %v1385 = vld [vmem:[#allocation5 + $0x4] sm:$0x3]
    %v1386 = vld [vmem:[#allocation5 + $0x6] sm:$0x3]
    %v1387 = vld [vmem:[#allocation5 + $0x8] sm:$0x3]
    %v1388 = vld [vmem:[#allocation5 + $0xa] sm:$0x3]
    %v1389 = vld [vmem:[#allocation5 + $0xc] sm:$0x3]
    %v1390 = vld [vmem:[#allocation5 + $0xe] sm:$0x3]
    %1399 = vrot.lane.b32.xlu0 %v1277, 127
    %v1400 = vpop.permute.xlu0 %1399
    %1401 = vrot.lane.b32.xlu0 %v1292, 127
    %v1402 = vpop.permute.xlu0 %1401
    %1403 = vrot.lane.b32.xlu0 %v1307, 127
    %v1404 = vpop.permute.xlu0 %1403
    %1405 = vrot.lane.b32.xlu0 %v1322, 127
    %v1406 = vpop.permute.xlu0 %1405
    %1407 = vrot.lane.b32.xlu0 %v1337, 127
    %v1408 = vpop.permute.xlu0 %1407
    %1409 = vrot.lane.b32.xlu0 %v1352, 127
    %v1410 = vpop.permute.xlu0 %1409
    %1411 = vrot.lane.b32.xlu0 %v1367, 127
    %v1412 = vpop.permute.xlu0 %1411
    %1413 = vrot.lane.b32.xlu0 %v1382, 127
    %v1414 = vpop.permute.xlu0 %1413
    %1423 = vxpose.xlu0.b32.start [1/16] %v1400, 128
    %1424 = vxpose.xlu0.b32.cont [2/16] 0.0, 128
    %1425 = vxpose.xlu0.b32.cont [3/16] 0.0, 128
    %1426 = vxpose.xlu0.b32.cont [4/16] 0.0, 128
    %1427 = vxpose.xlu0.b32.cont [5/16] 0.0, 128
    %1428 = vxpose.xlu0.b32.cont [6/16] 0.0, 128
    %1429 = vxpose.xlu0.b32.cont [7/16] 0.0, 128
    %1430 = vxpose.xlu0.b32.cont [8/16] 0.0, 128
    %1431 = vxpose.xlu0.b32.cont [9/16] 0.0, 128
    %1432 = vxpose.xlu0.b32.cont [10/16] 0.0, 128
    %1433 = vxpose.xlu0.b32.cont [11/16] 0.0, 128
    %1434 = vxpose.xlu0.b32.cont [12/16] 0.0, 128
    %1435 = vxpose.xlu0.b32.cont [13/16] 0.0, 128
    %1436 = vxpose.xlu0.b32.cont [14/16] 0.0, 128
    %1437 = vxpose.xlu0.b32.cont [15/16] 0.0, 128
    %1438 = vxpose.xlu0.b32.end [16/16] 0.0, 128
    %v1439 = vpop.trf.xlu0
    %v1440 = vpop.trf.xlu0
    %v1441 = vpop.trf.xlu0
    %v1442 = vpop.trf.xlu0
    %v1443 = vpop.trf.xlu0
    %v1444 = vpop.trf.xlu0
    %v1445 = vpop.trf.xlu0
    %v1446 = vpop.trf.xlu0
    %v1447 = vpop.trf.xlu0
    %v1448 = vpop.trf.xlu0
    %v1449 = vpop.trf.xlu0
    %v1450 = vpop.trf.xlu0
    %v1451 = vpop.trf.xlu0
    %v1452 = vpop.trf.xlu0
    %v1453 = vpop.trf.xlu0
    %v1454 = vpop.trf.xlu0
    %1455 = vxpose.xlu0.b32.start [1/16] %v1402, 128
    %1456 = vxpose.xlu0.b32.cont [2/16] 0.0, 128
    %1457 = vxpose.xlu0.b32.cont [3/16] 0.0, 128
    %1458 = vxpose.xlu0.b32.cont [4/16] 0.0, 128
    %1459 = vxpose.xlu0.b32.cont [5/16] 0.0, 128
    %1460 = vxpose.xlu0.b32.cont [6/16] 0.0, 128
    %1461 = vxpose.xlu0.b32.cont [7/16] 0.0, 128
    %1462 = vxpose.xlu0.b32.cont [8/16] 0.0, 128
    %1463 = vxpose.xlu0.b32.cont [9/16] 0.0, 128
    %1464 = vxpose.xlu0.b32.cont [10/16] 0.0, 128
    %1465 = vxpose.xlu0.b32.cont [11/16] 0.0, 128
    %1466 = vxpose.xlu0.b32.cont [12/16] 0.0, 128
    %1467 = vxpose.xlu0.b32.cont [13/16] 0.0, 128
    %1468 = vxpose.xlu0.b32.cont [14/16] 0.0, 128
    %1469 = vxpose.xlu0.b32.cont [15/16] 0.0, 128
    %1470 = vxpose.xlu0.b32.end [16/16] 0.0, 128
    %v1471 = vpop.trf.xlu0
    %v1472 = vpop.trf.xlu0
    %v1473 = vpop.trf.xlu0
    %v1474 = vpop.trf.xlu0
    %v1475 = vpop.trf.xlu0
    %v1476 = vpop.trf.xlu0
    %v1477 = vpop.trf.xlu0
    %v1478 = vpop.trf.xlu0
    %v1479 = vpop.trf.xlu0
    %v1480 = vpop.trf.xlu0
    %v1481 = vpop.trf.xlu0
    %v1482 = vpop.trf.xlu0
    %v1483 = vpop.trf.xlu0
    %v1484 = vpop.trf.xlu0
    %v1485 = vpop.trf.xlu0
    %v1486 = vpop.trf.xlu0
    %1487 = vxpose.xlu0.b32.start [1/16] %v1404, 128
    %1488 = vxpose.xlu0.b32.cont [2/16] 0.0, 128
    %1489 = vxpose.xlu0.b32.cont [3/16] 0.0, 128
    %1490 = vxpose.xlu0.b32.cont [4/16] 0.0, 128
    %1491 = vxpose.xlu0.b32.cont [5/16] 0.0, 128
    %1492 = vxpose.xlu0.b32.cont [6/16] 0.0, 128
    %1493 = vxpose.xlu0.b32.cont [7/16] 0.0, 128
    %1494 = vxpose.xlu0.b32.cont [8/16] 0.0, 128
    %1495 = vxpose.xlu0.b32.cont [9/16] 0.0, 128
    %1496 = vxpose.xlu0.b32.cont [10/16] 0.0, 128
    %1497 = vxpose.xlu0.b32.cont [11/16] 0.0, 128
    %1498 = vxpose.xlu0.b32.cont [12/16] 0.0, 128
    %1499 = vxpose.xlu0.b32.cont [13/16] 0.0, 128
    %1500 = vxpose.xlu0.b32.cont [14/16] 0.0, 128
    %1501 = vxpose.xlu0.b32.cont [15/16] 0.0, 128
    %1502 = vxpose.xlu0.b32.end [16/16] 0.0, 128
    %v1503 = vpop.trf.xlu0
    %v1504 = vpop.trf.xlu0
    %v1505 = vpop.trf.xlu0
    %v1506 = vpop.trf.xlu0
    %v1507 = vpop.trf.xlu0
    %v1508 = vpop.trf.xlu0
    %v1509 = vpop.trf.xlu0
    %v1510 = vpop.trf.xlu0
    %v1511 = vpop.trf.xlu0
    %v1512 = vpop.trf.xlu0
    %v1513 = vpop.trf.xlu0
    %v1514 = vpop.trf.xlu0
    %v1515 = vpop.trf.xlu0
    %v1516 = vpop.trf.xlu0
    %v1517 = vpop.trf.xlu0
    %v1518 = vpop.trf.xlu0
    %1519 = vxpose.xlu0.b32.start [1/16] %v1406, 128
    %1520 = vxpose.xlu0.b32.cont [2/16] 0.0, 128
    %1521 = vxpose.xlu0.b32.cont [3/16] 0.0, 128
    %1522 = vxpose.xlu0.b32.cont [4/16] 0.0, 128
    %1523 = vxpose.xlu0.b32.cont [5/16] 0.0, 128
    %1524 = vxpose.xlu0.b32.cont [6/16] 0.0, 128
    %1525 = vxpose.xlu0.b32.cont [7/16] 0.0, 128
    %1526 = vxpose.xlu0.b32.cont [8/16] 0.0, 128
    %1527 = vxpose.xlu0.b32.cont [9/16] 0.0, 128
    %1528 = vxpose.xlu0.b32.cont [10/16] 0.0, 128
    %1529 = vxpose.xlu0.b32.cont [11/16] 0.0, 128
    %1530 = vxpose.xlu0.b32.cont [12/16] 0.0, 128
    %1531 = vxpose.xlu0.b32.cont [13/16] 0.0, 128
    %1532 = vxpose.xlu0.b32.cont [14/16] 0.0, 128
    %1533 = vxpose.xlu0.b32.cont [15/16] 0.0, 128
    %1534 = vxpose.xlu0.b32.end [16/16] 0.0, 128
    %v1535 = vpop.trf.xlu0
    %v1536 = vpop.trf.xlu0
    %v1537 = vpop.trf.xlu0
    %v1538 = vpop.trf.xlu0
    %v1539 = vpop.trf.xlu0
    %v1540 = vpop.trf.xlu0
    %v1541 = vpop.trf.xlu0
    %v1542 = vpop.trf.xlu0
    %v1543 = vpop.trf.xlu0
    %v1544 = vpop.trf.xlu0
    %v1545 = vpop.trf.xlu0
    %v1546 = vpop.trf.xlu0
    %v1547 = vpop.trf.xlu0
    %v1548 = vpop.trf.xlu0
    %v1549 = vpop.trf.xlu0
    %v1550 = vpop.trf.xlu0
    %1551 = vxpose.xlu0.b32.start [1/16] %v1408, 128
    %1552 = vxpose.xlu0.b32.cont [2/16] 0.0, 128
    %1553 = vxpose.xlu0.b32.cont [3/16] 0.0, 128
    %1554 = vxpose.xlu0.b32.cont [4/16] 0.0, 128
    %1555 = vxpose.xlu0.b32.cont [5/16] 0.0, 128
    %1556 = vxpose.xlu0.b32.cont [6/16] 0.0, 128
    %1557 = vxpose.xlu0.b32.cont [7/16] 0.0, 128
    %1558 = vxpose.xlu0.b32.cont [8/16] 0.0, 128
    %1559 = vxpose.xlu0.b32.cont [9/16] 0.0, 128
    %1560 = vxpose.xlu0.b32.cont [10/16] 0.0, 128
    %1561 = vxpose.xlu0.b32.cont [11/16] 0.0, 128
    %1562 = vxpose.xlu0.b32.cont [12/16] 0.0, 128
    %1563 = vxpose.xlu0.b32.cont [13/16] 0.0, 128
    %1564 = vxpose.xlu0.b32.cont [14/16] 0.0, 128
    %1565 = vxpose.xlu0.b32.cont [15/16] 0.0, 128
    %1566 = vxpose.xlu0.b32.end [16/16] 0.0, 128
    %v1567 = vpop.trf.xlu0
    %v1568 = vpop.trf.xlu0
    %v1569 = vpop.trf.xlu0
    %v1570 = vpop.trf.xlu0
    %v1571 = vpop.trf.xlu0
    %v1572 = vpop.trf.xlu0
    %v1573 = vpop.trf.xlu0
    %v1574 = vpop.trf.xlu0
    %v1575 = vpop.trf.xlu0
    %v1576 = vpop.trf.xlu0
    %v1577 = vpop.trf.xlu0
    %v1578 = vpop.trf.xlu0
    %v1579 = vpop.trf.xlu0
    %v1580 = vpop.trf.xlu0
    %v1581 = vpop.trf.xlu0
    %v1582 = vpop.trf.xlu0
    %1583 = vxpose.xlu0.b32.start [1/16] %v1410, 128
    %1584 = vxpose.xlu0.b32.cont [2/16] 0.0, 128
    %1585 = vxpose.xlu0.b32.cont [3/16] 0.0, 128
    %1586 = vxpose.xlu0.b32.cont [4/16] 0.0, 128
    %1587 = vxpose.xlu0.b32.cont [5/16] 0.0, 128
    %1588 = vxpose.xlu0.b32.cont [6/16] 0.0, 128
    %1589 = vxpose.xlu0.b32.cont [7/16] 0.0, 128
    %1590 = vxpose.xlu0.b32.cont [8/16] 0.0, 128
    %1591 = vxpose.xlu0.b32.cont [9/16] 0.0, 128
    %1592 = vxpose.xlu0.b32.cont [10/16] 0.0, 128
    %1593 = vxpose.xlu0.b32.cont [11/16] 0.0, 128
    %1594 = vxpose.xlu0.b32.cont [12/16] 0.0, 128
    %1595 = vxpose.xlu0.b32.cont [13/16] 0.0, 128
    %1596 = vxpose.xlu0.b32.cont [14/16] 0.0, 128
    %1597 = vxpose.xlu0.b32.cont [15/16] 0.0, 128
    %1598 = vxpose.xlu0.b32.end [16/16] 0.0, 128
    %v1599 = vpop.trf.xlu0
    %v1600 = vpop.trf.xlu0
    %v1601 = vpop.trf.xlu0
    %v1602 = vpop.trf.xlu0
    %v1603 = vpop.trf.xlu0
    %v1604 = vpop.trf.xlu0
    %v1605 = vpop.trf.xlu0
    %v1606 = vpop.trf.xlu0
    %v1607 = vpop.trf.xlu0
    %v1608 = vpop.trf.xlu0
    %v1609 = vpop.trf.xlu0
    %v1610 = vpop.trf.xlu0
    %v1611 = vpop.trf.xlu0
    %v1612 = vpop.trf.xlu0
    %v1613 = vpop.trf.xlu0
    %v1614 = vpop.trf.xlu0
    %1615 = vxpose.xlu0.b32.start [1/16] %v1412, 128
    %1616 = vxpose.xlu0.b32.cont [2/16] 0.0, 128
    %1617 = vxpose.xlu0.b32.cont [3/16] 0.0, 128
    %1618 = vxpose.xlu0.b32.cont [4/16] 0.0, 128
    %1619 = vxpose.xlu0.b32.cont [5/16] 0.0, 128
    %1620 = vxpose.xlu0.b32.cont [6/16] 0.0, 128
    %1621 = vxpose.xlu0.b32.cont [7/16] 0.0, 128
    %1622 = vxpose.xlu0.b32.cont [8/16] 0.0, 128
    %1623 = vxpose.xlu0.b32.cont [9/16] 0.0, 128
    %1624 = vxpose.xlu0.b32.cont [10/16] 0.0, 128
    %1625 = vxpose.xlu0.b32.cont [11/16] 0.0, 128
    %1626 = vxpose.xlu0.b32.cont [12/16] 0.0, 128
    %1627 = vxpose.xlu0.b32.cont [13/16] 0.0, 128
    %1628 = vxpose.xlu0.b32.cont [14/16] 0.0, 128
    %1629 = vxpose.xlu0.b32.cont [15/16] 0.0, 128
    %1630 = vxpose.xlu0.b32.end [16/16] 0.0, 128
    %v1631 = vpop.trf.xlu0
    %v1632 = vpop.trf.xlu0
    %v1633 = vpop.trf.xlu0
    %v1634 = vpop.trf.xlu0
    %v1635 = vpop.trf.xlu0
    %v1636 = vpop.trf.xlu0
    %v1637 = vpop.trf.xlu0
    %v1638 = vpop.trf.xlu0
    %v1639 = vpop.trf.xlu0
    %v1640 = vpop.trf.xlu0
    %v1641 = vpop.trf.xlu0
    %v1642 = vpop.trf.xlu0
    %v1643 = vpop.trf.xlu0
    %v1644 = vpop.trf.xlu0
    %v1645 = vpop.trf.xlu0
    %v1646 = vpop.trf.xlu0
    %1647 = vxpose.xlu0.b32.start [1/16] %v1414, 128
    %1648 = vxpose.xlu0.b32.cont [2/16] 0.0, 128
    %1649 = vxpose.xlu0.b32.cont [3/16] 0.0, 128
    %1650 = vxpose.xlu0.b32.cont [4/16] 0.0, 128
    %1651 = vxpose.xlu0.b32.cont [5/16] 0.0, 128
    %1652 = vxpose.xlu0.b32.cont [6/16] 0.0, 128
    %1653 = vxpose.xlu0.b32.cont [7/16] 0.0, 128
    %1654 = vxpose.xlu0.b32.cont [8/16] 0.0, 128
    %1655 = vxpose.xlu0.b32.cont [9/16] 0.0, 128
    %1656 = vxpose.xlu0.b32.cont [10/16] 0.0, 128
    %1657 = vxpose.xlu0.b32.cont [11/16] 0.0, 128
    %1658 = vxpose.xlu0.b32.cont [12/16] 0.0, 128
    %1659 = vxpose.xlu0.b32.cont [13/16] 0.0, 128
    %1660 = vxpose.xlu0.b32.cont [14/16] 0.0, 128
    %1661 = vxpose.xlu0.b32.cont [15/16] 0.0, 128
    %1662 = vxpose.xlu0.b32.end [16/16] 0.0, 128
    %v1663 = vpop.trf.xlu0
    %v1664 = vpop.trf.xlu0
    %v1665 = vpop.trf.xlu0
    %v1666 = vpop.trf.xlu0
    %v1667 = vpop.trf.xlu0
    %v1668 = vpop.trf.xlu0
    %v1669 = vpop.trf.xlu0
    %v1670 = vpop.trf.xlu0
    %v1671 = vpop.trf.xlu0
    %v1672 = vpop.trf.xlu0
    %v1673 = vpop.trf.xlu0
    %v1674 = vpop.trf.xlu0
    %v1675 = vpop.trf.xlu0
    %v1676 = vpop.trf.xlu0
    %v1677 = vpop.trf.xlu0
    %v1678 = vpop.trf.xlu0
    %v1679 = vrot.slane %v1503, 4
    %vm1680 = vcmask 1047556
    %v1681 = vsel %vm1680, %v1679, %v1439
    %v1682 = vrot.slane %v1439, 4
    %v1683 = vsel %vm1680, %v1503, %v1682
    %v1685 = vunpack.c.l.s4 1983009808
    %v1686 = vunpack.c.0.s8 %v1685
    %v1687 = vperm.slane %v1681, %v1686
    %v1689 = vunpack.c.l.s4 1983009808
    %v1690 = vunpack.c.0.s8 %v1689
    %v1691 = vperm.slane %v1683, %v1690
    %v1692 = vrot.slane %v1535, 4
    %v1693 = vsel %vm1680, %v1692, %v1471
    %v1694 = vrot.slane %v1471, 4
    %v1695 = vsel %vm1680, %v1535, %v1694
    %v1697 = vunpack.c.l.s4 1983009808
    %v1698 = vunpack.c.0.s8 %v1697
    %v1699 = vperm.slane %v1693, %v1698
    %v1701 = vunpack.c.l.s4 1983009808
    %v1702 = vunpack.c.0.s8 %v1701
    %v1703 = vperm.slane %v1695, %v1702
    %v1704 = vrot.slane %v1631, 4
    %v1705 = vsel %vm1680, %v1704, %v1567
    %v1706 = vrot.slane %v1567, 4
    %v1707 = vsel %vm1680, %v1631, %v1706
    %v1709 = vunpack.c.l.s4 1983009808
    %v1710 = vunpack.c.0.s8 %v1709
    %v1711 = vperm.slane %v1705, %v1710
    %v1713 = vunpack.c.l.s4 1983009808
    %v1714 = vunpack.c.0.s8 %v1713
    %v1715 = vperm.slane %v1707, %v1714
    %v1716 = vrot.slane %v1663, 4
    %v1717 = vsel %vm1680, %v1716, %v1599
    %v1718 = vrot.slane %v1599, 4
    %v1719 = vsel %vm1680, %v1663, %v1718
    %v1721 = vunpack.c.l.s4 1983009808
    %v1722 = vunpack.c.0.s8 %v1721
    %v1723 = vperm.slane %v1717, %v1722
    %v1725 = vunpack.c.l.s4 1983009808
    %v1726 = vunpack.c.0.s8 %v1725
    %v1727 = vperm.slane %v1719, %v1726
    %v1728 = vrot.slane %v1699, 4
    %v1729 = vsel %vm1680, %v1728, %v1687
    %v1730 = vrot.slane %v1687, 4
    %v1731 = vsel %vm1680, %v1699, %v1730
    %v1733 = vunpack.c.l.s4 1934713408
    %v1734 = vunpack.c.0.s8 %v1733
    %v1735 = vperm.slane %v1729, %v1734
    %v1737 = vunpack.c.l.s4 1934713408
    %v1738 = vunpack.c.0.s8 %v1737
    %v1739 = vperm.slane %v1731, %v1738
    %v1740 = vrot.slane %v1703, 4
    %v1741 = vsel %vm1680, %v1740, %v1691
    %v1742 = vrot.slane %v1691, 4
    %v1743 = vsel %vm1680, %v1703, %v1742
    %v1745 = vunpack.c.l.s4 1934713408
    %v1746 = vunpack.c.0.s8 %v1745
    %v1747 = vperm.slane %v1741, %v1746
    %v1749 = vunpack.c.l.s4 1934713408
    %v1750 = vunpack.c.0.s8 %v1749
    %v1751 = vperm.slane %v1743, %v1750
    %v1752 = vrot.slane %v1723, 4
    %v1753 = vsel %vm1680, %v1752, %v1711
    %v1754 = vrot.slane %v1711, 4
    %v1755 = vsel %vm1680, %v1723, %v1754
    %v1757 = vunpack.c.l.s4 1934713408
    %v1758 = vunpack.c.0.s8 %v1757
    %v1759 = vperm.slane %v1753, %v1758
    %v1761 = vunpack.c.l.s4 1934713408
    %v1762 = vunpack.c.0.s8 %v1761
    %v1763 = vperm.slane %v1755, %v1762
    %v1764 = vrot.slane %v1727, 4
    %v1765 = vsel %vm1680, %v1764, %v1715
    %v1766 = vrot.slane %v1715, 4
    %v1767 = vsel %vm1680, %v1727, %v1766
    %v1769 = vunpack.c.l.s4 1934713408
    %v1770 = vunpack.c.0.s8 %v1769
    %v1771 = vperm.slane %v1765, %v1770
    %v1773 = vunpack.c.l.s4 1934713408
    %v1774 = vunpack.c.0.s8 %v1773
    %v1775 = vperm.slane %v1767, %v1774
    %v1776 = vrot.slane %v1759, 4
    %v1777 = vsel %vm1680, %v1776, %v1735
    %v1778 = vrot.slane %v1735, 4
    %v1779 = vsel %vm1680, %v1759, %v1778
    %v1780 = vrot.slane %v1763, 4
    %v1781 = vsel %vm1680, %v1780, %v1739
    %v1782 = vrot.slane %v1739, 4
    %v1783 = vsel %vm1680, %v1763, %v1782
    %v1784 = vrot.slane %v1771, 4
    %v1785 = vsel %vm1680, %v1784, %v1747
    %v1786 = vrot.slane %v1747, 4
    %v1787 = vsel %vm1680, %v1771, %v1786
    %v1788 = vrot.slane %v1775, 4
    %v1789 = vsel %vm1680, %v1788, %v1751
    %v1790 = vrot.slane %v1751, 4
    %v1791 = vsel %vm1680, %v1775, %v1790
    %v1792 = vrot.slane %v1504, 4
    %v1793 = vsel %vm1680, %v1792, %v1440
    %v1794 = vrot.slane %v1440, 4
    %v1795 = vsel %vm1680, %v1504, %v1794
    %v1797 = vunpack.c.l.s4 1983009808
    %v1798 = vunpack.c.0.s8 %v1797
    %v1799 = vperm.slane %v1793, %v1798
    %v1801 = vunpack.c.l.s4 1983009808
    %v1802 = vunpack.c.0.s8 %v1801
    %v1803 = vperm.slane %v1795, %v1802
    %v1804 = vrot.slane %v1536, 4
    %v1805 = vsel %vm1680, %v1804, %v1472
    %v1806 = vrot.slane %v1472, 4
    %v1807 = vsel %vm1680, %v1536, %v1806
    %v1809 = vunpack.c.l.s4 1983009808
    %v1810 = vunpack.c.0.s8 %v1809
    %v1811 = vperm.slane %v1805, %v1810
    %v1813 = vunpack.c.l.s4 1983009808
    %v1814 = vunpack.c.0.s8 %v1813
    %v1815 = vperm.slane %v1807, %v1814
    %v1816 = vrot.slane %v1632, 4
    %v1817 = vsel %vm1680, %v1816, %v1568
    %v1818 = vrot.slane %v1568, 4
    %v1819 = vsel %vm1680, %v1632, %v1818
    %v1821 = vunpack.c.l.s4 1983009808
    %v1822 = vunpack.c.0.s8 %v1821
    %v1823 = vperm.slane %v1817, %v1822
    %v1825 = vunpack.c.l.s4 1983009808
    %v1826 = vunpack.c.0.s8 %v1825
    %v1827 = vperm.slane %v1819, %v1826
    %v1828 = vrot.slane %v1664, 4
    %v1829 = vsel %vm1680, %v1828, %v1600
    %v1830 = vrot.slane %v1600, 4
    %v1831 = vsel %vm1680, %v1664, %v1830
    %v1833 = vunpack.c.l.s4 1983009808
    %v1834 = vunpack.c.0.s8 %v1833
    %v1835 = vperm.slane %v1829, %v1834
    %v1837 = vunpack.c.l.s4 1983009808
    %v1838 = vunpack.c.0.s8 %v1837
    %v1839 = vperm.slane %v1831, %v1838
    %v1840 = vrot.slane %v1811, 4
    %v1841 = vsel %vm1680, %v1840, %v1799
    %v1842 = vrot.slane %v1799, 4
    %v1843 = vsel %vm1680, %v1811, %v1842
    %v1845 = vunpack.c.l.s4 1934713408
    %v1846 = vunpack.c.0.s8 %v1845
    %v1847 = vperm.slane %v1841, %v1846
    %v1849 = vunpack.c.l.s4 1934713408
    %v1850 = vunpack.c.0.s8 %v1849
    %v1851 = vperm.slane %v1843, %v1850
    %v1852 = vrot.slane %v1815, 4
    %v1853 = vsel %vm1680, %v1852, %v1803
    %v1854 = vrot.slane %v1803, 4
    %v1855 = vsel %vm1680, %v1815, %v1854
    %v1857 = vunpack.c.l.s4 1934713408
    %v1858 = vunpack.c.0.s8 %v1857
    %v1859 = vperm.slane %v1853, %v1858
    %v1861 = vunpack.c.l.s4 1934713408
    %v1862 = vunpack.c.0.s8 %v1861
    %v1863 = vperm.slane %v1855, %v1862
    %v1864 = vrot.slane %v1835, 4
    %v1865 = vsel %vm1680, %v1864, %v1823
    %v1866 = vrot.slane %v1823, 4
    %v1867 = vsel %vm1680, %v1835, %v1866
    %v1869 = vunpack.c.l.s4 1934713408
    %v1870 = vunpack.c.0.s8 %v1869
    %v1871 = vperm.slane %v1865, %v1870
    %v1873 = vunpack.c.l.s4 1934713408
    %v1874 = vunpack.c.0.s8 %v1873
    %v1875 = vperm.slane %v1867, %v1874
    %v1876 = vrot.slane %v1839, 4
    %v1877 = vsel %vm1680, %v1876, %v1827
    %v1878 = vrot.slane %v1827, 4
    %v1879 = vsel %vm1680, %v1839, %v1878
    %v1881 = vunpack.c.l.s4 1934713408
    %v1882 = vunpack.c.0.s8 %v1881
    %v1883 = vperm.slane %v1877, %v1882
    %v1885 = vunpack.c.l.s4 1934713408
    %v1886 = vunpack.c.0.s8 %v1885
    %v1887 = vperm.slane %v1879, %v1886
    %v1888 = vrot.slane %v1871, 4
    %v1889 = vsel %vm1680, %v1888, %v1847
    %v1890 = vrot.slane %v1847, 4
    %v1891 = vsel %vm1680, %v1871, %v1890
    %v1892 = vrot.slane %v1875, 4
    %v1893 = vsel %vm1680, %v1892, %v1851
    %v1894 = vrot.slane %v1851, 4
    %v1895 = vsel %vm1680, %v1875, %v1894
    %v1896 = vrot.slane %v1883, 4
    %v1897 = vsel %vm1680, %v1896, %v1859
    %v1898 = vrot.slane %v1859, 4
    %v1899 = vsel %vm1680, %v1883, %v1898
    %v1900 = vrot.slane %v1887, 4
    %v1901 = vsel %vm1680, %v1900, %v1863
    %1902 = vxpose.xlu0.b32.start [1/16] %v1777, 128
    %1903 = vxpose.xlu0.b32.cont [2/16] 0.0, 128
    %1904 = vxpose.xlu0.b32.cont [3/16] 0.0, 128
    %1905 = vxpose.xlu0.b32.cont [4/16] 0.0, 128
    %1906 = vxpose.xlu0.b32.cont [5/16] 0.0, 128
    %1907 = vxpose.xlu0.b32.cont [6/16] 0.0, 128
    %1908 = vxpose.xlu0.b32.cont [7/16] 0.0, 128
    %1909 = vxpose.xlu0.b32.cont [8/16] 0.0, 128
    %1910 = vxpose.xlu0.b32.cont [9/16] 0.0, 128
    %1911 = vxpose.xlu0.b32.cont [10/16] 0.0, 128
    %1912 = vxpose.xlu0.b32.cont [11/16] 0.0, 128
    %1913 = vxpose.xlu0.b32.cont [12/16] 0.0, 128
    %1914 = vxpose.xlu0.b32.cont [13/16] 0.0, 128
    %1915 = vxpose.xlu0.b32.cont [14/16] 0.0, 128
    %1916 = vxpose.xlu0.b32.cont [15/16] 0.0, 128
    %1917 = vxpose.xlu0.b32.end [16/16] 0.0, 128
    %v1918 = vpop.trf.xlu0
    %v1919 = vpop.trf.xlu0
    %v1920 = vpop.trf.xlu0
    %v1921 = vpop.trf.xlu0
    %v1922 = vpop.trf.xlu0
    %v1923 = vpop.trf.xlu0
    %v1924 = vpop.trf.xlu0
    %v1925 = vpop.trf.xlu0
    %v1926 = vpop.trf.xlu0
    %v1927 = vpop.trf.xlu0
    %v1928 = vpop.trf.xlu0
    %v1929 = vpop.trf.xlu0
    %v1930 = vpop.trf.xlu0
    %v1931 = vpop.trf.xlu0
    %v1932 = vpop.trf.xlu0
    %v1933 = vpop.trf.xlu0
    %1934 = vxpose.xlu0.b32.start [1/16] %v1779, 128
    %1935 = vxpose.xlu0.b32.cont [2/16] 0.0, 128
    %1936 = vxpose.xlu0.b32.cont [3/16] 0.0, 128
    %1937 = vxpose.xlu0.b32.cont [4/16] 0.0, 128
    %1938 = vxpose.xlu0.b32.cont [5/16] 0.0, 128
    %1939 = vxpose.xlu0.b32.cont [6/16] 0.0, 128
    %1940 = vxpose.xlu0.b32.cont [7/16] 0.0, 128
    %1941 = vxpose.xlu0.b32.cont [8/16] 0.0, 128
    %1942 = vxpose.xlu0.b32.cont [9/16] 0.0, 128
    %1943 = vxpose.xlu0.b32.cont [10/16] 0.0, 128
    %1944 = vxpose.xlu0.b32.cont [11/16] 0.0, 128
    %1945 = vxpose.xlu0.b32.cont [12/16] 0.0, 128
    %1946 = vxpose.xlu0.b32.cont [13/16] 0.0, 128
    %1947 = vxpose.xlu0.b32.cont [14/16] 0.0, 128
    %1948 = vxpose.xlu0.b32.cont [15/16] 0.0, 128
    %1949 = vxpose.xlu0.b32.end [16/16] 0.0, 128
    %v1950 = vpop.trf.xlu0
    %v1951 = vpop.trf.xlu0
    %v1952 = vpop.trf.xlu0
    %v1953 = vpop.trf.xlu0
    %v1954 = vpop.trf.xlu0
    %v1955 = vpop.trf.xlu0
    %v1956 = vpop.trf.xlu0
    %v1957 = vpop.trf.xlu0
    %v1958 = vpop.trf.xlu0
    %v1959 = vpop.trf.xlu0
    %v1960 = vpop.trf.xlu0
    %v1961 = vpop.trf.xlu0
    %v1962 = vpop.trf.xlu0
    %v1963 = vpop.trf.xlu0
    %v1964 = vpop.trf.xlu0
    %v1965 = vpop.trf.xlu0
    %1966 = vxpose.xlu0.b32.start [1/16] %v1781, 128
    %1967 = vxpose.xlu0.b32.cont [2/16] 0.0, 128
    %1968 = vxpose.xlu0.b32.cont [3/16] 0.0, 128
    %1969 = vxpose.xlu0.b32.cont [4/16] 0.0, 128
    %1970 = vxpose.xlu0.b32.cont [5/16] 0.0, 128
    %1971 = vxpose.xlu0.b32.cont [6/16] 0.0, 128
    %1972 = vxpose.xlu0.b32.cont [7/16] 0.0, 128
    %1973 = vxpose.xlu0.b32.cont [8/16] 0.0, 128
    %1974 = vxpose.xlu0.b32.cont [9/16] 0.0, 128
    %1975 = vxpose.xlu0.b32.cont [10/16] 0.0, 128
    %1976 = vxpose.xlu0.b32.cont [11/16] 0.0, 128
    %1977 = vxpose.xlu0.b32.cont [12/16] 0.0, 128
    %1978 = vxpose.xlu0.b32.cont [13/16] 0.0, 128
    %1979 = vxpose.xlu0.b32.cont [14/16] 0.0, 128
    %1980 = vxpose.xlu0.b32.cont [15/16] 0.0, 128
    %1981 = vxpose.xlu0.b32.end [16/16] 0.0, 128
    %v1982 = vpop.trf.xlu0
    %v1983 = vpop.trf.xlu0
    %v1984 = vpop.trf.xlu0
    %v1985 = vpop.trf.xlu0
    %v1986 = vpop.trf.xlu0
    %v1987 = vpop.trf.xlu0
    %v1988 = vpop.trf.xlu0
    %v1989 = vpop.trf.xlu0
    %v1990 = vpop.trf.xlu0
    %v1991 = vpop.trf.xlu0
    %v1992 = vpop.trf.xlu0
    %v1993 = vpop.trf.xlu0
    %v1994 = vpop.trf.xlu0
    %v1995 = vpop.trf.xlu0
    %v1996 = vpop.trf.xlu0
    %v1997 = vpop.trf.xlu0
    %1998 = vxpose.xlu0.b32.start [1/16] %v1783, 128
    %1999 = vxpose.xlu0.b32.cont [2/16] 0.0, 128
    %2000 = vxpose.xlu0.b32.cont [3/16] 0.0, 128
    %2001 = vxpose.xlu0.b32.cont [4/16] 0.0, 128
    %2002 = vxpose.xlu0.b32.cont [5/16] 0.0, 128
    %2003 = vxpose.xlu0.b32.cont [6/16] 0.0, 128
    %2004 = vxpose.xlu0.b32.cont [7/16] 0.0, 128
    %2005 = vxpose.xlu0.b32.cont [8/16] 0.0, 128
    %2006 = vxpose.xlu0.b32.cont [9/16] 0.0, 128
    %2007 = vxpose.xlu0.b32.cont [10/16] 0.0, 128
    %2008 = vxpose.xlu0.b32.cont [11/16] 0.0, 128
    %2009 = vxpose.xlu0.b32.cont [12/16] 0.0, 128
    %2010 = vxpose.xlu0.b32.cont [13/16] 0.0, 128
    %2011 = vxpose.xlu0.b32.cont [14/16] 0.0, 128
    %2012 = vxpose.xlu0.b32.cont [15/16] 0.0, 128
    %2013 = vxpose.xlu0.b32.end [16/16] 0.0, 128
    %v2014 = vpop.trf.xlu0
    %v2015 = vpop.trf.xlu0
    %v2016 = vpop.trf.xlu0
    %v2017 = vpop.trf.xlu0
    %v2018 = vpop.trf.xlu0
    %v2019 = vpop.trf.xlu0
    %v2020 = vpop.trf.xlu0
    %v2021 = vpop.trf.xlu0
    %v2022 = vpop.trf.xlu0
    %v2023 = vpop.trf.xlu0
    %v2024 = vpop.trf.xlu0
    %v2025 = vpop.trf.xlu0
    %v2026 = vpop.trf.xlu0
    %v2027 = vpop.trf.xlu0
    %v2028 = vpop.trf.xlu0
    %v2029 = vpop.trf.xlu0
    %2030 = vxpose.xlu0.b32.start [1/16] %v1785, 128
    %2031 = vxpose.xlu0.b32.cont [2/16] 0.0, 128
    %2032 = vxpose.xlu0.b32.cont [3/16] 0.0, 128
    %2033 = vxpose.xlu0.b32.cont [4/16] 0.0, 128
    %2034 = vxpose.xlu0.b32.cont [5/16] 0.0, 128
    %2035 = vxpose.xlu0.b32.cont [6/16] 0.0, 128
    %2036 = vxpose.xlu0.b32.cont [7/16] 0.0, 128
    %2037 = vxpose.xlu0.b32.cont [8/16] 0.0, 128
    %2038 = vxpose.xlu0.b32.cont [9/16] 0.0, 128
    %2039 = vxpose.xlu0.b32.cont [10/16] 0.0, 128
    %2040 = vxpose.xlu0.b32.cont [11/16] 0.0, 128
    %2041 = vxpose.xlu0.b32.cont [12/16] 0.0, 128
    %2042 = vxpose.xlu0.b32.cont [13/16] 0.0, 128
    %2043 = vxpose.xlu0.b32.cont [14/16] 0.0, 128
    %2044 = vxpose.xlu0.b32.cont [15/16] 0.0, 128
    %2045 = vxpose.xlu0.b32.end [16/16] 0.0, 128
    %v2046 = vpop.trf.xlu0
    %v2047 = vpop.trf.xlu0
    %v2048 = vpop.trf.xlu0
    %v2049 = vpop.trf.xlu0
    %v2050 = vpop.trf.xlu0
    %v2051 = vpop.trf.xlu0
    %v2052 = vpop.trf.xlu0
    %v2053 = vpop.trf.xlu0
    %v2054 = vpop.trf.xlu0
    %v2055 = vpop.trf.xlu0
    %v2056 = vpop.trf.xlu0
    %v2057 = vpop.trf.xlu0
    %v2058 = vpop.trf.xlu0
    %v2059 = vpop.trf.xlu0
    %v2060 = vpop.trf.xlu0
    %v2061 = vpop.trf.xlu0
    %2062 = vxpose.xlu0.b32.start [1/16] %v1787, 128
    %2063 = vxpose.xlu0.b32.cont [2/16] 0.0, 128
    %2064 = vxpose.xlu0.b32.cont [3/16] 0.0, 128
    %2065 = vxpose.xlu0.b32.cont [4/16] 0.0, 128
    %2066 = vxpose.xlu0.b32.cont [5/16] 0.0, 128
    %2067 = vxpose.xlu0.b32.cont [6/16] 0.0, 128
    %2068 = vxpose.xlu0.b32.cont [7/16] 0.0, 128
    %2069 = vxpose.xlu0.b32.cont [8/16] 0.0, 128
    %2070 = vxpose.xlu0.b32.cont [9/16] 0.0, 128
    %2071 = vxpose.xlu0.b32.cont [10/16] 0.0, 128
    %2072 = vxpose.xlu0.b32.cont [11/16] 0.0, 128
    %2073 = vxpose.xlu0.b32.cont [12/16] 0.0, 128
    %2074 = vxpose.xlu0.b32.cont [13/16] 0.0, 128
    %2075 = vxpose.xlu0.b32.cont [14/16] 0.0, 128
    %2076 = vxpose.xlu0.b32.cont [15/16] 0.0, 128
    %2077 = vxpose.xlu0.b32.end [16/16] 0.0, 128
    %v2078 = vpop.trf.xlu0
    %v2079 = vpop.trf.xlu0
    %v2080 = vpop.trf.xlu0
    %v2081 = vpop.trf.xlu0
    %v2082 = vpop.trf.xlu0
    %v2083 = vpop.trf.xlu0
    %v2084 = vpop.trf.xlu0
    %v2085 = vpop.trf.xlu0
    %v2086 = vpop.trf.xlu0
    %v2087 = vpop.trf.xlu0
    %v2088 = vpop.trf.xlu0
    %v2089 = vpop.trf.xlu0
    %v2090 = vpop.trf.xlu0
    %v2091 = vpop.trf.xlu0
    %v2092 = vpop.trf.xlu0
    %v2093 = vpop.trf.xlu0
    %2094 = vxpose.xlu0.b32.start [1/16] %v1789, 128
    %2095 = vxpose.xlu0.b32.cont [2/16] 0.0, 128
    %2096 = vxpose.xlu0.b32.cont [3/16] 0.0, 128
    %2097 = vxpose.xlu0.b32.cont [4/16] 0.0, 128
    %2098 = vxpose.xlu0.b32.cont [5/16] 0.0, 128
    %2099 = vxpose.xlu0.b32.cont [6/16] 0.0, 128
    %2100 = vxpose.xlu0.b32.cont [7/16] 0.0, 128
    %2101 = vxpose.xlu0.b32.cont [8/16] 0.0, 128
    %2102 = vxpose.xlu0.b32.cont [9/16] 0.0, 128
    %2103 = vxpose.xlu0.b32.cont [10/16] 0.0, 128
    %2104 = vxpose.xlu0.b32.cont [11/16] 0.0, 128
    %2105 = vxpose.xlu0.b32.cont [12/16] 0.0, 128
    %2106 = vxpose.xlu0.b32.cont [13/16] 0.0, 128
    %2107 = vxpose.xlu0.b32.cont [14/16] 0.0, 128
    %2108 = vxpose.xlu0.b32.cont [15/16] 0.0, 128
    %2109 = vxpose.xlu0.b32.end [16/16] 0.0, 128
    %v2110 = vpop.trf.xlu0
    %v2111 = vpop.trf.xlu0
    %v2112 = vpop.trf.xlu0
    %v2113 = vpop.trf.xlu0
    %v2114 = vpop.trf.xlu0
    %v2115 = vpop.trf.xlu0
    %v2116 = vpop.trf.xlu0
    %v2117 = vpop.trf.xlu0
    %v2118 = vpop.trf.xlu0
    %v2119 = vpop.trf.xlu0
    %v2120 = vpop.trf.xlu0
    %v2121 = vpop.trf.xlu0
    %v2122 = vpop.trf.xlu0
    %v2123 = vpop.trf.xlu0
    %v2124 = vpop.trf.xlu0
    %v2125 = vpop.trf.xlu0
    %2126 = vxpose.xlu0.b32.start [1/16] %v1791, 128
    %2127 = vxpose.xlu0.b32.cont [2/16] 0.0, 128
    %2128 = vxpose.xlu0.b32.cont [3/16] 0.0, 128
    %2129 = vxpose.xlu0.b32.cont [4/16] 0.0, 128
    %2130 = vxpose.xlu0.b32.cont [5/16] 0.0, 128
    %2131 = vxpose.xlu0.b32.cont [6/16] 0.0, 128
    %2132 = vxpose.xlu0.b32.cont [7/16] 0.0, 128
    %2133 = vxpose.xlu0.b32.cont [8/16] 0.0, 128
    %2134 = vxpose.xlu0.b32.cont [9/16] 0.0, 128
    %2135 = vxpose.xlu0.b32.cont [10/16] 0.0, 128
    %2136 = vxpose.xlu0.b32.cont [11/16] 0.0, 128
    %2137 = vxpose.xlu0.b32.cont [12/16] 0.0, 128
    %2138 = vxpose.xlu0.b32.cont [13/16] 0.0, 128
    %2139 = vxpose.xlu0.b32.cont [14/16] 0.0, 128
    %2140 = vxpose.xlu0.b32.cont [15/16] 0.0, 128
    %2141 = vxpose.xlu0.b32.end [16/16] 0.0, 128
    %v2142 = vpop.trf.xlu0
    %v2143 = vpop.trf.xlu0
    %v2144 = vpop.trf.xlu0
    %v2145 = vpop.trf.xlu0
    %v2146 = vpop.trf.xlu0
    %v2147 = vpop.trf.xlu0
    %v2148 = vpop.trf.xlu0
    %v2149 = vpop.trf.xlu0
    %v2150 = vpop.trf.xlu0
    %v2151 = vpop.trf.xlu0
    %v2152 = vpop.trf.xlu0
    %v2153 = vpop.trf.xlu0
    %v2154 = vpop.trf.xlu0
    %v2155 = vpop.trf.xlu0
    %v2156 = vpop.trf.xlu0
    %v2157 = vpop.trf.xlu0
    %2158 = vxpose.xlu0.b32.start [1/16] %v1889, 128
    %2159 = vxpose.xlu0.b32.cont [2/16] 0.0, 128
    %2160 = vxpose.xlu0.b32.cont [3/16] 0.0, 128
    %2161 = vxpose.xlu0.b32.cont [4/16] 0.0, 128
    %2162 = vxpose.xlu0.b32.cont [5/16] 0.0, 128
    %2163 = vxpose.xlu0.b32.cont [6/16] 0.0, 128
    %2164 = vxpose.xlu0.b32.cont [7/16] 0.0, 128
    %2165 = vxpose.xlu0.b32.cont [8/16] 0.0, 128
    %2166 = vxpose.xlu0.b32.cont [9/16] 0.0, 128
    %2167 = vxpose.xlu0.b32.cont [10/16] 0.0, 128
    %2168 = vxpose.xlu0.b32.cont [11/16] 0.0, 128
    %2169 = vxpose.xlu0.b32.cont [12/16] 0.0, 128
    %2170 = vxpose.xlu0.b32.cont [13/16] 0.0, 128
    %2171 = vxpose.xlu0.b32.cont [14/16] 0.0, 128
    %2172 = vxpose.xlu0.b32.cont [15/16] 0.0, 128
    %2173 = vxpose.xlu0.b32.end [16/16] 0.0, 128
    %v2174 = vpop.trf.xlu0
    %v2175 = vpop.trf.xlu0
    %v2176 = vpop.trf.xlu0
    %v2177 = vpop.trf.xlu0
    %v2178 = vpop.trf.xlu0
    %v2179 = vpop.trf.xlu0
    %v2180 = vpop.trf.xlu0
    %v2181 = vpop.trf.xlu0
    %v2182 = vpop.trf.xlu0
    %v2183 = vpop.trf.xlu0
    %v2184 = vpop.trf.xlu0
    %v2185 = vpop.trf.xlu0
    %v2186 = vpop.trf.xlu0
    %v2187 = vpop.trf.xlu0
    %v2188 = vpop.trf.xlu0
    %v2189 = vpop.trf.xlu0
    %2190 = vxpose.xlu0.b32.start [1/16] %v1891, 128
    %2191 = vxpose.xlu0.b32.cont [2/16] 0.0, 128
    %2192 = vxpose.xlu0.b32.cont [3/16] 0.0, 128
    %2193 = vxpose.xlu0.b32.cont [4/16] 0.0, 128
    %2194 = vxpose.xlu0.b32.cont [5/16] 0.0, 128
    %2195 = vxpose.xlu0.b32.cont [6/16] 0.0, 128
    %2196 = vxpose.xlu0.b32.cont [7/16] 0.0, 128
    %2197 = vxpose.xlu0.b32.cont [8/16] 0.0, 128
    %2198 = vxpose.xlu0.b32.cont [9/16] 0.0, 128
    %2199 = vxpose.xlu0.b32.cont [10/16] 0.0, 128
    %2200 = vxpose.xlu0.b32.cont [11/16] 0.0, 128
    %2201 = vxpose.xlu0.b32.cont [12/16] 0.0, 128
    %2202 = vxpose.xlu0.b32.cont [13/16] 0.0, 128
    %2203 = vxpose.xlu0.b32.cont [14/16] 0.0, 128
    %2204 = vxpose.xlu0.b32.cont [15/16] 0.0, 128
    %2205 = vxpose.xlu0.b32.end [16/16] 0.0, 128
    %v2206 = vpop.trf.xlu0
    %v2207 = vpop.trf.xlu0
    %v2208 = vpop.trf.xlu0
    %v2209 = vpop.trf.xlu0
    %v2210 = vpop.trf.xlu0
    %v2211 = vpop.trf.xlu0
    %v2212 = vpop.trf.xlu0
    %v2213 = vpop.trf.xlu0
    %v2214 = vpop.trf.xlu0
    %v2215 = vpop.trf.xlu0
    %v2216 = vpop.trf.xlu0
    %v2217 = vpop.trf.xlu0
    %v2218 = vpop.trf.xlu0
    %v2219 = vpop.trf.xlu0
    %v2220 = vpop.trf.xlu0
    %v2221 = vpop.trf.xlu0
    %2222 = vxpose.xlu0.b32.start [1/16] %v1893, 128
    %2223 = vxpose.xlu0.b32.cont [2/16] 0.0, 128
    %2224 = vxpose.xlu0.b32.cont [3/16] 0.0, 128
    %2225 = vxpose.xlu0.b32.cont [4/16] 0.0, 128
    %2226 = vxpose.xlu0.b32.cont [5/16] 0.0, 128
    %2227 = vxpose.xlu0.b32.cont [6/16] 0.0, 128
    %2228 = vxpose.xlu0.b32.cont [7/16] 0.0, 128
    %2229 = vxpose.xlu0.b32.cont [8/16] 0.0, 128
    %2230 = vxpose.xlu0.b32.cont [9/16] 0.0, 128
    %2231 = vxpose.xlu0.b32.cont [10/16] 0.0, 128
    %2232 = vxpose.xlu0.b32.cont [11/16] 0.0, 128
    %2233 = vxpose.xlu0.b32.cont [12/16] 0.0, 128
    %2234 = vxpose.xlu0.b32.cont [13/16] 0.0, 128
    %2235 = vxpose.xlu0.b32.cont [14/16] 0.0, 128
    %2236 = vxpose.xlu0.b32.cont [15/16] 0.0, 128
    %2237 = vxpose.xlu0.b32.end [16/16] 0.0, 128
    %v2238 = vpop.trf.xlu0
    %v2239 = vpop.trf.xlu0
    %v2240 = vpop.trf.xlu0
    %v2241 = vpop.trf.xlu0
    %v2242 = vpop.trf.xlu0
    %v2243 = vpop.trf.xlu0
    %v2244 = vpop.trf.xlu0
    %v2245 = vpop.trf.xlu0
    %v2246 = vpop.trf.xlu0
    %v2247 = vpop.trf.xlu0
    %v2248 = vpop.trf.xlu0
    %v2249 = vpop.trf.xlu0
    %v2250 = vpop.trf.xlu0
    %v2251 = vpop.trf.xlu0
    %v2252 = vpop.trf.xlu0
    %v2253 = vpop.trf.xlu0
    %2254 = vxpose.xlu0.b32.start [1/16] %v1895, 128
    %2255 = vxpose.xlu0.b32.cont [2/16] 0.0, 128
    %2256 = vxpose.xlu0.b32.cont [3/16] 0.0, 128
    %2257 = vxpose.xlu0.b32.cont [4/16] 0.0, 128
    %2258 = vxpose.xlu0.b32.cont [5/16] 0.0, 128
    %2259 = vxpose.xlu0.b32.cont [6/16] 0.0, 128
    %2260 = vxpose.xlu0.b32.cont [7/16] 0.0, 128
    %2261 = vxpose.xlu0.b32.cont [8/16] 0.0, 128
    %2262 = vxpose.xlu0.b32.cont [9/16] 0.0, 128
    %2263 = vxpose.xlu0.b32.cont [10/16] 0.0, 128
    %2264 = vxpose.xlu0.b32.cont [11/16] 0.0, 128
    %2265 = vxpose.xlu0.b32.cont [12/16] 0.0, 128
    %2266 = vxpose.xlu0.b32.cont [13/16] 0.0, 128
    %2267 = vxpose.xlu0.b32.cont [14/16] 0.0, 128
    %2268 = vxpose.xlu0.b32.cont [15/16] 0.0, 128
    %2269 = vxpose.xlu0.b32.end [16/16] 0.0, 128
    %v2270 = vpop.trf.xlu0
    %v2271 = vpop.trf.xlu0
    %v2272 = vpop.trf.xlu0
    %v2273 = vpop.trf.xlu0
    %v2274 = vpop.trf.xlu0
    %v2275 = vpop.trf.xlu0
    %v2276 = vpop.trf.xlu0
    %v2277 = vpop.trf.xlu0
    %v2278 = vpop.trf.xlu0
    %v2279 = vpop.trf.xlu0
    %v2280 = vpop.trf.xlu0
    %v2281 = vpop.trf.xlu0
    %v2282 = vpop.trf.xlu0
    %v2283 = vpop.trf.xlu0
    %v2284 = vpop.trf.xlu0
    %v2285 = vpop.trf.xlu0
    %2286 = vxpose.xlu0.b32.start [1/16] %v1897, 128
    %2287 = vxpose.xlu0.b32.cont [2/16] 0.0, 128
    %2288 = vxpose.xlu0.b32.cont [3/16] 0.0, 128
    %2289 = vxpose.xlu0.b32.cont [4/16] 0.0, 128
    %2290 = vxpose.xlu0.b32.cont [5/16] 0.0, 128
    %2291 = vxpose.xlu0.b32.cont [6/16] 0.0, 128
    %2292 = vxpose.xlu0.b32.cont [7/16] 0.0, 128
    %2293 = vxpose.xlu0.b32.cont [8/16] 0.0, 128
    %2294 = vxpose.xlu0.b32.cont [9/16] 0.0, 128
    %2295 = vxpose.xlu0.b32.cont [10/16] 0.0, 128
    %2296 = vxpose.xlu0.b32.cont [11/16] 0.0, 128
    %2297 = vxpose.xlu0.b32.cont [12/16] 0.0, 128
    %2298 = vxpose.xlu0.b32.cont [13/16] 0.0, 128
    %2299 = vxpose.xlu0.b32.cont [14/16] 0.0, 128
    %2300 = vxpose.xlu0.b32.cont [15/16] 0.0, 128
    %2301 = vxpose.xlu0.b32.end [16/16] 0.0, 128
    %v2302 = vpop.trf.xlu0
    %v2303 = vpop.trf.xlu0
    %v2304 = vpop.trf.xlu0
    %v2305 = vpop.trf.xlu0
    %v2306 = vpop.trf.xlu0
    %v2307 = vpop.trf.xlu0
    %v2308 = vpop.trf.xlu0
    %v2309 = vpop.trf.xlu0
    %v2310 = vpop.trf.xlu0
    %v2311 = vpop.trf.xlu0
    %v2312 = vpop.trf.xlu0
    %v2313 = vpop.trf.xlu0
    %v2314 = vpop.trf.xlu0
    %v2315 = vpop.trf.xlu0
    %v2316 = vpop.trf.xlu0
    %v2317 = vpop.trf.xlu0
    %2318 = vxpose.xlu0.b32.start [1/16] %v1899, 128
    %2319 = vxpose.xlu0.b32.cont [2/16] 0.0, 128
    %2320 = vxpose.xlu0.b32.cont [3/16] 0.0, 128
    %2321 = vxpose.xlu0.b32.cont [4/16] 0.0, 128
    %2322 = vxpose.xlu0.b32.cont [5/16] 0.0, 128
    %2323 = vxpose.xlu0.b32.cont [6/16] 0.0, 128
    %2324 = vxpose.xlu0.b32.cont [7/16] 0.0, 128
    %2325 = vxpose.xlu0.b32.cont [8/16] 0.0, 128
    %2326 = vxpose.xlu0.b32.cont [9/16] 0.0, 128
    %2327 = vxpose.xlu0.b32.cont [10/16] 0.0, 128
    %2328 = vxpose.xlu0.b32.cont [11/16] 0.0, 128
    %2329 = vxpose.xlu0.b32.cont [12/16] 0.0, 128
    %2330 = vxpose.xlu0.b32.cont [13/16] 0.0, 128
    %2331 = vxpose.xlu0.b32.cont [14/16] 0.0, 128
    %2332 = vxpose.xlu0.b32.cont [15/16] 0.0, 128
    %2333 = vxpose.xlu0.b32.end [16/16] 0.0, 128
    %v2334 = vpop.trf.xlu0
    %v2335 = vpop.trf.xlu0
    %v2336 = vpop.trf.xlu0
    %v2337 = vpop.trf.xlu0
    %v2338 = vpop.trf.xlu0
    %v2339 = vpop.trf.xlu0
    %v2340 = vpop.trf.xlu0
    %v2341 = vpop.trf.xlu0
    %v2342 = vpop.trf.xlu0
    %v2343 = vpop.trf.xlu0
    %v2344 = vpop.trf.xlu0
    %v2345 = vpop.trf.xlu0
    %v2346 = vpop.trf.xlu0
    %v2347 = vpop.trf.xlu0
    %v2348 = vpop.trf.xlu0
    %v2349 = vpop.trf.xlu0
    %2350 = vxpose.xlu0.b32.start [1/16] %v1901, 128
    %2351 = vxpose.xlu0.b32.cont [2/16] 0.0, 128
    %2352 = vxpose.xlu0.b32.cont [3/16] 0.0, 128
    %2353 = vxpose.xlu0.b32.cont [4/16] 0.0, 128
    %2354 = vxpose.xlu0.b32.cont [5/16] 0.0, 128
    %2355 = vxpose.xlu0.b32.cont [6/16] 0.0, 128
    %2356 = vxpose.xlu0.b32.cont [7/16] 0.0, 128
    %2357 = vxpose.xlu0.b32.cont [8/16] 0.0, 128
    %2358 = vxpose.xlu0.b32.cont [9/16] 0.0, 128
    %2359 = vxpose.xlu0.b32.cont [10/16] 0.0, 128
    %2360 = vxpose.xlu0.b32.cont [11/16] 0.0, 128
    %2361 = vxpose.xlu0.b32.cont [12/16] 0.0, 128
    %2362 = vxpose.xlu0.b32.cont [13/16] 0.0, 128
    %2363 = vxpose.xlu0.b32.cont [14/16] 0.0, 128
    %2364 = vxpose.xlu0.b32.cont [15/16] 0.0, 128
    %2365 = vxpose.xlu0.b32.end [16/16] 0.0, 128
    %v2366 = vpop.trf.xlu0
    %v2367 = vpop.trf.xlu0
    %v2368 = vpop.trf.xlu0
    %v2369 = vpop.trf.xlu0
    %v2370 = vpop.trf.xlu0
    %v2371 = vpop.trf.xlu0
    %v2372 = vpop.trf.xlu0
    %v2373 = vpop.trf.xlu0
    %v2374 = vpop.trf.xlu0
    %v2375 = vpop.trf.xlu0
    %v2376 = vpop.trf.xlu0
    %v2377 = vpop.trf.xlu0
    %v2378 = vpop.trf.xlu0
    %v2379 = vpop.trf.xlu0
    %v2380 = vpop.trf.xlu0
    %v2381 = vpop.trf.xlu0
    %v2382 = vrot.slane %v1982, 4
    %v2383 = vsel %vm1680, %v2382, %v1918
    %v2385 = vunpack.c.l.s4 1983009808
    %v2386 = vunpack.c.0.s8 %v2385
    %v2387 = vperm.slane %v2383, %v2386
    %v2388 = vrot.slane %v2014, 4
    %v2389 = vsel %vm1680, %v2388, %v1950
    %v2391 = vunpack.c.l.s4 1983009808
    %v2392 = vunpack.c.0.s8 %v2391
    %v2393 = vperm.slane %v2389, %v2392
    %v2394 = vrot.slane %v2110, 4
    %v2395 = vsel %vm1680, %v2394, %v2046
    %v2397 = vunpack.c.l.s4 1983009808
    %v2398 = vunpack.c.0.s8 %v2397
    %v2399 = vperm.slane %v2395, %v2398
    %v2400 = vrot.slane %v2142, 4
    %v2401 = vsel %vm1680, %v2400, %v2078
    %v2403 = vunpack.c.l.s4 1983009808
    %v2404 = vunpack.c.0.s8 %v2403
    %v2405 = vperm.slane %v2401, %v2404
    %v2406 = vrot.slane %v2393, 4
    %v2407 = vsel %vm1680, %v2406, %v2387
    %v2409 = vunpack.c.l.s4 1934713408
    %v2410 = vunpack.c.0.s8 %v2409
    %v2411 = vperm.slane %v2407, %v2410
    %v2412 = vrot.slane %v2405, 4
    %v2413 = vsel %vm1680, %v2412, %v2399
    %v2415 = vunpack.c.l.s4 1934713408
    %v2416 = vunpack.c.0.s8 %v2415
    %v2417 = vperm.slane %v2413, %v2416
    %v2418 = vrot.slane %v2417, 4
    %v2419 = vsel %vm1680, %v2418, %v2411
    %v2420 = vrot.slane %v2411, 4
    %v2421 = vsel %vm1680, %v2417, %v2420
    %v2422 = vrot.slane %v2238, 4
    %v2423 = vsel %vm1680, %v2422, %v2174
    %v2425 = vunpack.c.l.s4 1983009808
    %v2426 = vunpack.c.0.s8 %v2425
    %v2427 = vperm.slane %v2423, %v2426
    %v2428 = vrot.slane %v2270, 4
    %v2429 = vsel %vm1680, %v2428, %v2206
    %v2431 = vunpack.c.l.s4 1983009808
    %v2432 = vunpack.c.0.s8 %v2431
    %v2433 = vperm.slane %v2429, %v2432
    %v2434 = vrot.slane %v2366, 4
    %v2435 = vsel %vm1680, %v2434, %v2302
    %v2437 = vunpack.c.l.s4 1983009808
    %v2438 = vunpack.c.0.s8 %v2437
    %v2439 = vperm.slane %v2435, %v2438
    %v2440 = vrot.slane %v2433, 4
    %v2441 = vsel %vm1680, %v2440, %v2427
    %v2443 = vunpack.c.l.s4 1934713408
    %v2444 = vunpack.c.0.s8 %v2443
    %v2445 = vperm.slane %v2441, %v2444
    %v2446 = vrot.slane %v2334, 4
    %v2447 = vsel %vm1680, %v2446, %v2439
    %v2449 = vunpack.c.l.s4 1934713408
    %v2450 = vunpack.c.0.s8 %v2449
    %v2451 = vperm.slane %v2447, %v2450
    %v2452 = vrot.slane %v2451, 4
    %v2453 = vsel %vm1680, %v2452, %v2445
    %v2454 = vrot.slane %v2445, 4
    %v2455 = vsel %vm1680, %v2451, %v2454
    %v2456 = vrot.slane %v1385, 4
    %v2457 = vsel %vm1680, %v2456, %v1383
    %v2459 = vunpack.c.l.s4 1983009808
    %v2460 = vunpack.c.0.s8 %v2459
    %v2461 = vperm.slane %v2457, %v2460
    %v2462 = vrot.slane %v1386, 4
    %v2463 = vsel %vm1680, %v2462, %v1384
    %v2465 = vunpack.c.l.s4 1983009808
    %v2466 = vunpack.c.0.s8 %v2465
    %v2467 = vperm.slane %v2463, %v2466
    %v2468 = vrot.slane %v1389, 4
    %v2469 = vsel %vm1680, %v2468, %v1387
    %v2471 = vunpack.c.l.s4 1983009808
    %v2472 = vunpack.c.0.s8 %v2471
    %v2473 = vperm.slane %v2469, %v2472
    %v2474 = vrot.slane %v1390, 4
    %v2475 = vsel %vm1680, %v2474, %v1388
    %v2477 = vunpack.c.l.s4 1983009808
    %v2478 = vunpack.c.0.s8 %v2477
    %v2479 = vperm.slane %v2475, %v2478
    %v2480 = vrot.slane %v2467, 4
    %v2481 = vsel %vm1680, %v2480, %v2461
    %v2483 = vunpack.c.l.s4 1934713408
    %v2484 = vunpack.c.0.s8 %v2483
    %v2485 = vperm.slane %v2481, %v2484
    %v2486 = vrot.slane %v2479, 4
    %v2487 = vsel %vm1680, %v2486, %v2473
    %v2489 = vunpack.c.l.s4 1934713408
    %v2490 = vunpack.c.0.s8 %v2489
    %v2491 = vperm.slane %v2487, %v2490
    %v2492 = vrot.slane %v2491, 4
    %v2493 = vsel %vm1680, %v2492, %v2485
    %v2494 = vrot.slane %v2485, 4
    %v2495 = vsel %vm1680, %v2491, %v2494
    %vm2496 = vcmask 64512
    %v2498 = vsel %vm2496, %v2419, 0
    %v2501 = vsel %vm2496, %v2453, 0
    %2503 = vmatpush.msra.mxu0 0.0
    %2504 = vmatpush.msra.mxu0 0.0
    %2505 = vmatpush.msra.mxu0 0.0
    %2506 = vmatpush.msra.mxu0 0.0
    %2507 = vmatpush.msra.mxu0 0.0
    %2508 = vmatpush.msra.mxu0 0.0
    %2509 = vmatpush.msra.mxu0 0.0
    %2510 = vmatpush.msra.mxu0 0.0
    %2511 = vmatpush.msra.mxu0 0.0
    %2512 = vmatpush.msra.mxu0 0.0
    %2513 = vmatpush.msra.mxu0 0.0
    %2514 = vmatpush.msra.mxu0 0.0
    %2515 = vmatpush.msra.mxu0 0.0
    %2516 = vmatpush.msra.mxu0 0.0
    %2517 = vmatpush.msra.mxu0 0.0
    %2518 = vmatpush.msra.mxu0 %v2493
    %2519 = vmatmul.f32.gmra.mxu0 %v2498
    %v2520 = vpop.f32.mrf.mxu0
    %v2521 = vadd.f32 0.0, %v2520
    %2522 = vmatmul.f32.gmra.mxu0 %v2501
    %v2523 = vpop.f32.mrf.mxu0
    %v2524 = vadd.f32 0.0, %v2523
    %2525 = vdwg.mxu0
    %v2527 = vsel %vm2496, %v2421, 0
    %v2530 = vsel %vm2496, %v2455, 0
    %2532 = vmatpush.msra.mxu0 0.0
    %2533 = vmatpush.msra.mxu0 0.0
    %2534 = vmatpush.msra.mxu0 0.0
    %2535 = vmatpush.msra.mxu0 0.0
    %2536 = vmatpush.msra.mxu0 0.0
    %2537 = vmatpush.msra.mxu0 0.0
    %2538 = vmatpush.msra.mxu0 0.0
    %2539 = vmatpush.msra.mxu0 0.0
    %2540 = vmatpush.msra.mxu0 0.0
    %2541 = vmatpush.msra.mxu0 0.0
    %2542 = vmatpush.msra.mxu0 0.0
    %2543 = vmatpush.msra.mxu0 0.0
    %2544 = vmatpush.msra.mxu0 0.0
    %2545 = vmatpush.msra.mxu0 0.0
    %2546 = vmatpush.msra.mxu0 0.0
    %2547 = vmatpush.msra.mxu0 %v2495
    %2548 = vmatmul.f32.gmra.mxu0 %v2527
    %v2549 = vpop.f32.mrf.mxu0
    %v2550 = vadd.f32 0.0, %v2549
    %2551 = vmatmul.f32.gmra.mxu0 %v2530
    %v2552 = vpop.f32.mrf.mxu0
    %v2553 = vadd.f32 0.0, %v2552
    %2554 = vdwg.mxu0
    %2555 = vst.msk [vmem:[%s6] sm:$0xff] %vm164, %v2521
    %vm2556 = vcmask 260096
    %2557 = vst.msk [vmem:[%s6 + $0x8] sm:$0x7f] %vm2556, %v2524
    %2558 = vst.msk [vmem:[%s6 + $0x10] sm:$0xff] %vm164, %v2550
    %2559 = vst.msk [vmem:[%s6 + $0x18] sm:$0x7f] %vm2556, %v2553
    // Predicated region
    $region38: #{tpu_custom_call.1} parent=1 // pred_check
      _
    $region39: #{tpu_custom_call.1} parent=1 // pred_check_branch
      %2561 = sbr.rel (0) target = $region41
    $region40: #{tpu_custom_call.1} parent=1 // pred_region
      %2563 = vsyncadd [#allocation4], 0
      %s2564 = sshll.u32 [#allocation10], 4
      %s2565 = int_to_ptr.vmem [resolvable:$true] %s2564
      %s2566 = sshll.u32 %s5, 4
      %s2567 = int_to_ptr.hbm [resolvable:$true] %s2566
      %2572 = dma.vmem_to_hbm [thread:$0]  %s2565, 256, %s2567, [#allocation4], 32, 32, 2
    $region41: #{tpu_custom_call.1} parent=1 // pred_fallthru
      _
    // Predicated region
    $region42: #{tpu_custom_call.1} parent=1 // pred_check
      _
    $region43: #{tpu_custom_call.1} parent=1 // pred_check_branch
      %2574 = sbr.rel (0) target = $region45
    $region44: #{tpu_custom_call.1} parent=1 // pred_region
      _
    $region45: #{tpu_custom_call.1} parent=1 // pred_fallthru
      _
    // Predicated region
    $region46: #{tpu_custom_call.1} parent=1 // pred_check
      _
    $region47: #{tpu_custom_call.1} parent=1 // pred_check_branch
      %2576 = sbr.rel (0) target = $region49
    $region48: #{tpu_custom_call.1} parent=1 // pred_region
      %2578 = dma.done [#allocation4], 256
    $region49: #{tpu_custom_call.1} parent=1 // pred_fallthru
      _
    // Predicated region
    $region50: #{tpu_custom_call.1} parent=1 // pred_check
      _
    $region51: #{tpu_custom_call.1} parent=1 // pred_check_branch
      %2580 = sbr.rel (0) target = $region53
    $region52: #{tpu_custom_call.1} parent=1 // pred_region
      _
    $region53: #{tpu_custom_call.1} parent=1 // pred_fallthru
      _
    %2581 = vsyncpa [#allocation3], 1
    %2582 = vsyncpa [#allocation6], 1
    %2583 = vsyncpa [#allocation9], 1
    %2584 = vsyncpa [#allocation4], 1

</llo_original>
